<compile_context>
chip_gen: v5e
topology: v5e:2x2
jax: 0.10.0
libtpu: 0.0.40
codegen_flags: <defaults>
</compile_context>

<pallas_src>
import functools

import jax
import jax.numpy as jnp
from jax.experimental import pallas as pl
from jax.experimental.pallas import tpu as pltpu

LANE = 128                   # pad last-layer width to a lane-dense multiple of 128
TB_MIN = 128                 # minimum batch tile (MXU / (8,128) friendly)
TB_MAX = 2048                # largest batch tile (measured HBM-roofline sweet spot)
X_TILE_BYTES_CAP = 8 << 20   # per-buffer cap for the streamed f32 x slab (double-buffered)


def mlp_kernel(x_ref, w1_ref, b1_ref, w2_ref, b2_ref, w3_ref, b3_ref, o_ref):
    # In-kernel bf16 cast of the streamed f32 x tile: free VPU filler under the x DMA.
    x = x_ref[...].astype(jnp.bfloat16)
    # Layer 1: x @ W1 + b1, ReLU  (bf16 operands on the MXU, f32 accumulation)
    h1 = jnp.dot(x, w1_ref[...], preferred_element_type=jnp.float32)
    h1 = jnp.maximum(h1 + b1_ref[...], 0.0)
    # Layer 2: h1 @ W2 + b2, ReLU
    h2 = jnp.dot(h1.astype(jnp.bfloat16), w2_ref[...], preferred_element_type=jnp.float32)
    h2 = jnp.maximum(h2 + b2_ref[...], 0.0)
    # Layer 3: h2 @ W3 + b3  (Q-values; lane-padded to 128 cols, stored bf16)
    out = jnp.dot(h2.astype(jnp.bfloat16), w3_ref[...], preferred_element_type=jnp.float32)
    o_ref[...] = (out + b3_ref[...]).astype(o_ref.dtype)


def _pick_tb(batch, obs_size):
    """Largest tile whose f32 x slab fits the per-buffer cap, capped at TB_MAX, while
    guaranteeing >=2 grid steps when the batch allows it (keeps both v7x TCs busy)."""
    cap = (X_TILE_BYTES_CAP // (obs_size * 4)) // TB_MIN * TB_MIN
    cap = max(TB_MIN, min(TB_MAX, cap))
    padded = pl.cdiv(batch, TB_MIN) * TB_MIN
    half = (padded // 2) // TB_MIN * TB_MIN
    return max(TB_MIN, min(cap, half))


@functools.partial(jax.jit, static_argnames=("tb", "action_size"))
def _mlp_forward_2d(x2d, w1, b1, w2, b2, w3, b3, *, tb, action_size):
    batch, obs_size = x2d.shape
    hidden = w1.shape[1]
    act_pad = pl.cdiv(action_size, LANE) * LANE

    # bf16 weights for the MXU; zero-pad last layer columns to a lane-dense width.
    # (These are tiny ops on ~150K params; the big x stream is NOT pre-cast or padded.)
    w1b = w1.astype(jnp.bfloat16)
    w2b = w2.astype(jnp.bfloat16)
    w3b = jnp.pad(w3, ((0, 0), (0, act_pad - action_size))).astype(jnp.bfloat16)
    b1f = b1.astype(jnp.float32)
    b2f = b2.astype(jnp.float32)
    b3p = jnp.pad(b3, ((0, 0), (0, act_pad - action_size))).astype(jnp.float32)

    grid = (pl.cdiv(batch, tb),)     # ragged last tile: OOB reads are per-row garbage
                                     # (rows are independent), OOB writes are dropped.

    const2d = lambda i: (0, 0)       # same block every step -> weights stay VMEM-resident

    flops = 2 * batch * (obs_size * hidden + hidden * hidden + hidden * act_pad)
    bytes_accessed = (batch * obs_size * 4                                        # x (f32 in)
                      + (obs_size * hidden + hidden * hidden + hidden * act_pad) * 2  # weights
                      + (2 * hidden + act_pad) * 4                                # biases
                      + batch * act_pad * 2)                                      # out (bf16)

    out = pl.pallas_call(
        mlp_kernel,
        out_shape=jax.ShapeDtypeStruct((batch, act_pad), jnp.bfloat16),
        grid_spec=pltpu.PrefetchScalarGridSpec(
            num_scalar_prefetch=0,
            grid=grid,
            in_specs=[
                pl.BlockSpec((tb, obs_size), lambda i: (i, 0)),   # x tile (f32, streamed)
                pl.BlockSpec((obs_size, hidden), const2d),        # W1 (bf16)
                pl.BlockSpec((1, hidden), const2d),               # b1 (f32)
                pl.BlockSpec((hidden, hidden), const2d),          # W2 (bf16)
                pl.BlockSpec((1, hidden), const2d),               # b2 (f32)
                pl.BlockSpec((hidden, act_pad), const2d),         # W3 padded (bf16)
                pl.BlockSpec((1, act_pad), const2d),              # b3 padded (f32)
            ],
            out_specs=pl.BlockSpec((tb, act_pad), lambda i: (i, 0)),
        ),
        compiler_params=pltpu.CompilerParams(
            dimension_semantics=("parallel",),      # megacore sharding on v7x when grid >= 2
            vmem_limit_bytes=48 * 1024 * 1024,      # v5e default scoped VMEM is only 16 MiB
        ),
        cost_estimate=pl.CostEstimate(
            flops=flops, transcendentals=0, bytes_accessed=bytes_accessed),
    )(x2d, w1b, b1f, w2b, b2f, w3b, b3p)

    # Slice away the lane padding and return f32 Q-values (tiny op, fused by XLA).
    return out[:, :action_size].astype(jnp.float32)


def mlp_forward(x, params):
    """x: any shape whose trailing dims flatten to obs_size (e.g. NCHW [B,C,H,W]).

    Matches torch: x.reshape(-1, obs_size) -> Linear/ReLU/Linear/ReLU/Linear.
    Weights are stored [in, out] (transposed vs. torch nn.Linear.weight).
    """
    w1, b1, w2, b2, w3, b3 = params
    obs_size = w1.shape[0]
    action_size = w3.shape[1]
    x2d = x.reshape(-1, obs_size)
    tb = _pick_tb(x2d.shape[0], obs_size)
    return _mlp_forward_2d(x2d, w1, b1, w2, b2, w3, b3, tb=tb, action_size=action_size)


def init_params(key, obs_size, action_size, hidden_size=128):
    """Deterministic init mimicking nn.Linear's default U(-1/sqrt(fan_in), 1/sqrt(fan_in)).
    Weights are stored [in, out] (transposed vs. torch) so the kernel does x @ W."""
    keys = jax.random.split(key, 6)

    def linear(kw, kb, fan_in, fan_out):
        bound = 1.0 / jnp.sqrt(jnp.float32(fan_in))
        w = jax.random.uniform(kw, (fan_in, fan_out), jnp.float32, -bound, bound)
        b = jax.random.uniform(kb, (1, fan_out), jnp.float32, -bound, bound)
        return w, b

    w1, b1 = linear(keys[0], keys[1], obs_size, hidden_size)
    w2, b2 = linear(keys[2], keys[3], hidden_size, hidden_size)
    w3, b3 = linear(keys[4], keys[5], hidden_size, action_size)
    return (w1, b1, w2, b2, w3, b3)


def mlp_reference(x, params):
    """Pure-JAX reference using the same bf16-operand / f32-accumulate / bf16-store recipe."""
    w1, b1, w2, b2, w3, b3 = params
    bf = lambda a: a.astype(jnp.bfloat16).astype(jnp.float32)
    x2d = bf(x.reshape(-1, w1.shape[0]))
    h1 = jnp.maximum(x2d @ bf(w1) + b1, 0.0)
    h2 = jnp.maximum(bf(h1) @ bf(w2) + b2, 0.0)
    out = bf(h2) @ bf(w3) + b3
    return bf(out)   # kernel stores bf16 Q-values


# TODO(synk): sample_action's epsilon-greedy branch uses host-side Python RNG; it stays on
# the host (argmax over the returned Q-values), so only forward() is implemented as a kernel.

if __name__ == "__main__":
    key = jax.random.PRNGKey(0)
    k_x, k_p, k_x2 = jax.random.split(key, 3)

    # Small NCHW observation: batch=2, channels=4, spatial=16x16 -> obs_size = 1024
    B, C, H, W = 2, 4, 16, 16
    obs_size = C * H * W
    action_size = 7      # e.g. SIMPLE_MOVEMENT action set size for super-mario-bros
    hidden_size = 128

    params = init_params(k_p, obs_size, action_size, hidden_size)

    # Case 1: small NCHW batch (exercises MLP.forward's reshape(-1, obs_size)).
    x = jax.random.normal(k_x, (B, C, H, W), dtype=jnp.float32)
    out = jax.block_until_ready(mlp_forward(x, params))
    ref = mlp_reference(x, params)
    assert out.shape == (B, action_size), out.shape
    assert jnp.allclose(out, ref, atol=1e-2, rtol=1e-2), "mismatch vs reference (case 1)"

    # Case 2: flat batch exercising multiple grid steps and a ragged last tile.
    x2 = jax.random.normal(k_x2, (300, obs_size), dtype=jnp.float32)
    out2 = jax.block_until_ready(mlp_forward(x2, params))
    ref2 = mlp_reference(x2, params)
    assert out2.shape == (300, action_size), out2.shape
    assert jnp.allclose(out2, ref2, atol=1e-2, rtol=1e-2), "mismatch vs reference (case 2)"

    print("KERNEL_OK")
</pallas_src>

<mosaic_0001>
module attributes {stable_mosaic.version = 11 : i64} {
  func.func @mlp_kernel(%arg0: i32, %arg1: memref<128x1024xf32, #tpu.memory_space<vmem>>, %arg2: memref<1024x128xbf16, #tpu.memory_space<vmem>>, %arg3: memref<1x128xf32, #tpu.memory_space<vmem>>, %arg4: memref<128x128xbf16, #tpu.memory_space<vmem>>, %arg5: memref<1x128xf32, #tpu.memory_space<vmem>>, %arg6: memref<128x128xbf16, #tpu.memory_space<vmem>>, %arg7: memref<1x128xf32, #tpu.memory_space<vmem>>, %arg8: memref<128x128xbf16, #tpu.memory_space<vmem>>) attributes {dimension_semantics = [#tpu.dimension_semantics<parallel>], iteration_bounds = array<i64: 1>, scalar_prefetch = 0 : i64, scratch_operands = 0 : i64, tpu.core_type = #tpu.core_type<tc>, window_params = [{transform_indices = @transform_0, window_bounds = array<i64: 128, 1024>}, {pipeline_mode = #tpu.pipeline_mode<synchronous>, transform_indices = @transform_1, window_bounds = array<i64: 1024, 128>}, {pipeline_mode = #tpu.pipeline_mode<synchronous>, transform_indices = @transform_2, window_bounds = array<i64: 1, 128>}, {pipeline_mode = #tpu.pipeline_mode<synchronous>, transform_indices = @transform_3, window_bounds = array<i64: 128, 128>}, {pipeline_mode = #tpu.pipeline_mode<synchronous>, transform_indices = @transform_4, window_bounds = array<i64: 1, 128>}, {pipeline_mode = #tpu.pipeline_mode<synchronous>, transform_indices = @transform_5, window_bounds = array<i64: 128, 128>}, {pipeline_mode = #tpu.pipeline_mode<synchronous>, transform_indices = @transform_6, window_bounds = array<i64: 1, 128>}, {transform_indices = @transform_7, window_bounds = array<i64: 128, 128>}]} {
    %c0 = arith.constant 0 : index
    %c0_0 = arith.constant 0 : index
    %0 = vector.load %arg1[%c0, %c0_0] : memref<128x1024xf32, #tpu.memory_space<vmem>>, vector<128x1024xf32>
    %1 = arith.truncf %0 : vector<128x1024xf32> to vector<128x1024xbf16>
    %c0_1 = arith.constant 0 : index
    %c0_2 = arith.constant 0 : index
    %2 = vector.load %arg2[%c0_1, %c0_2] : memref<1024x128xbf16, #tpu.memory_space<vmem>>, vector<1024x128xbf16>
    %cst = arith.constant dense<0.000000e+00> : vector<128x128xf32>
    %3 = tpu.matmul %1, %2, %cst {dimension_numbers = #tpu.dot_dimension_numbers<[1], [0], [0], [1], [0, 0, 1, 1], [], []>} : vector<128x1024xbf16>, vector<1024x128xbf16>, vector<128x128xf32> -> vector<128x128xf32>
    %c0_3 = arith.constant 0 : index
    %c0_4 = arith.constant 0 : index
    %4 = vector.load %arg3[%c0_3, %c0_4] : memref<1x128xf32, #tpu.memory_space<vmem>>, vector<1x128xf32>
    %5 = vector.broadcast %4 : vector<1x128xf32> to vector<128x128xf32>
    %6 = arith.addf %3, %5 : vector<128x128xf32>
    %cst_5 = arith.constant 0.000000e+00 : f32
    %7 = vector.broadcast %cst_5 : f32 to vector<128x128xf32>
    %8 = arith.maximumf %6, %7 : vector<128x128xf32>
    %9 = arith.truncf %8 : vector<128x128xf32> to vector<128x128xbf16>
    %c0_6 = arith.constant 0 : index
    %c0_7 = arith.constant 0 : index
    %10 = vector.load %arg4[%c0_6, %c0_7] : memref<128x128xbf16, #tpu.memory_space<vmem>>, vector<128x128xbf16>
    %cst_8 = arith.constant dense<0.000000e+00> : vector<128x128xf32>
    %11 = tpu.matmul %9, %10, %cst_8 {dimension_numbers = #tpu.dot_dimension_numbers<[1], [0], [0], [1], [0, 0, 1, 1], [], []>} : vector<128x128xbf16>, vector<128x128xbf16>, vector<128x128xf32> -> vector<128x128xf32>
    %c0_9 = arith.constant 0 : index
    %c0_10 = arith.constant 0 : index
    %12 = vector.load %arg5[%c0_9, %c0_10] : memref<1x128xf32, #tpu.memory_space<vmem>>, vector<1x128xf32>
    %13 = vector.broadcast %12 : vector<1x128xf32> to vector<128x128xf32>
    %14 = arith.addf %11, %13 : vector<128x128xf32>
    %cst_11 = arith.constant 0.000000e+00 : f32
    %15 = vector.broadcast %cst_11 : f32 to vector<128x128xf32>
    %16 = arith.maximumf %14, %15 : vector<128x128xf32>
    %17 = arith.truncf %16 : vector<128x128xf32> to vector<128x128xbf16>
    %c0_12 = arith.constant 0 : index
    %c0_13 = arith.constant 0 : index
    %18 = vector.load %arg6[%c0_12, %c0_13] : memref<128x128xbf16, #tpu.memory_space<vmem>>, vector<128x128xbf16>
    %cst_14 = arith.constant dense<0.000000e+00> : vector<128x128xf32>
    %19 = tpu.matmul %17, %18, %cst_14 {dimension_numbers = #tpu.dot_dimension_numbers<[1], [0], [0], [1], [0, 0, 1, 1], [], []>} : vector<128x128xbf16>, vector<128x128xbf16>, vector<128x128xf32> -> vector<128x128xf32>
    %c0_15 = arith.constant 0 : index
    %c0_16 = arith.constant 0 : index
    %20 = vector.load %arg7[%c0_15, %c0_16] : memref<1x128xf32, #tpu.memory_space<vmem>>, vector<1x128xf32>
    %21 = vector.broadcast %20 : vector<1x128xf32> to vector<128x128xf32>
    %22 = arith.addf %19, %21 : vector<128x128xf32>
    %23 = arith.truncf %22 : vector<128x128xf32> to vector<128x128xbf16>
    %c0_17 = arith.constant 0 : index
    %c0_18 = arith.constant 0 : index
    %24 = vector.load %arg8[%c0_17, %c0_18] : memref<128x128xbf16, #tpu.memory_space<vmem>>, vector<128x128xbf16>
    tpu.vector_store %arg8[%c0_17, %c0_18], %23 {strides = array<i32>} : memref<128x128xbf16, #tpu.memory_space<vmem>>, vector<128x128xbf16>,
    return
  }
  func.func @transform_0(%arg0: i32) -> (i32, i32) {
    %c0_i32 = arith.constant 0 : i32
    %c0_i32_0 = arith.constant 0 : i32
    return %arg0, %c0_i32 : i32, i32
  }
  func.func @transform_1(%arg0: i32) -> (i32, i32) {
    %c0_i32 = arith.constant 0 : i32
    %c0_i32_0 = arith.constant 0 : i32
    %c0_i32_1 = arith.constant 0 : i32
    return %c0_i32, %c0_i32_0 : i32, i32
  }
  func.func @transform_2(%arg0: i32) -> (i32, i32) {
    %c0_i32 = arith.constant 0 : i32
    %c0_i32_0 = arith.constant 0 : i32
    %c0_i32_1 = arith.constant 0 : i32
    return %c0_i32, %c0_i32_0 : i32, i32
  }
  func.func @transform_3(%arg0: i32) -> (i32, i32) {
    %c0_i32 = arith.constant 0 : i32
    %c0_i32_0 = arith.constant 0 : i32
    %c0_i32_1 = arith.constant 0 : i32
    return %c0_i32, %c0_i32_0 : i32, i32
  }
  func.func @transform_4(%arg0: i32) -> (i32, i32) {
    %c0_i32 = arith.constant 0 : i32
    %c0_i32_0 = arith.constant 0 : i32
    %c0_i32_1 = arith.constant 0 : i32
    return %c0_i32, %c0_i32_0 : i32, i32
  }
  func.func @transform_5(%arg0: i32) -> (i32, i32) {
    %c0_i32 = arith.constant 0 : i32
    %c0_i32_0 = arith.constant 0 : i32
    %c0_i32_1 = arith.constant 0 : i32
    return %c0_i32, %c0_i32_0 : i32, i32
  }
  func.func @transform_6(%arg0: i32) -> (i32, i32) {
    %c0_i32 = arith.constant 0 : i32
    %c0_i32_0 = arith.constant 0 : i32
    %c0_i32_1 = arith.constant 0 : i32
    return %c0_i32, %c0_i32_0 : i32, i32
  }
  func.func @transform_7(%arg0: i32) -> (i32, i32) {
    %c0_i32 = arith.constant 0 : i32
    %c0_i32_0 = arith.constant 0 : i32
    return %arg0, %c0_i32 : i32, i32
  }
}

</mosaic_0001>

<llo_original>
// kernel: _mlp_forward_2d.1
$region0: #{_mlp_forward_2d.1}
  #allocation0 [shape = 'u32[]', space=smem, size = 0x4, offset = 0x4, fixed_abs, tag = 'smem constant byte address 0x4 - core index']
  #allocation1 [shape = 'u32[72,128]{1,0:T(1,128)}', space=vmem, size = 0x9000, scoped, tag = 'internal scratch']
  %s0 = inlined_call_operand.vmem [shape: f32[2,1024], index: 0, kind: input, shape index: {}]
  %s1 = inlined_call_operand.vmem [shape: bf16[1024,128], index: 1, kind: input, shape index: {}]
  %s2 = inlined_call_operand.vmem [shape: f32[1,128], index: 2, kind: input, shape index: {}]
  %s3 = inlined_call_operand.vmem [shape: bf16[128,128], index: 3, kind: input, shape index: {}]
  %s4 = inlined_call_operand.vmem [shape: f32[1,128], index: 4, kind: input, shape index: {}]
  %s5 = inlined_call_operand.vmem [shape: bf16[128,128], index: 5, kind: input, shape index: {}]
  %s6 = inlined_call_operand.vmem [shape: f32[1,128], index: 6, kind: input, shape index: {}]
  %s7 = inlined_call_operand.vmem [shape: bf16[2,128], index: 7, kind: output, shape index: {}]
  %s8 = sld [smem:[#allocation0]]
  $region68: #{_mlp_forward_2d.1} parent=0
    _
  %s10 = ssub.s32 1, %s8
  %s11 = scalar_select 0, %s10, %s8
  $region1: #{_mlp_forward_2d.1} parent=0
    #allocation2 [shape = 'u8[32768]{0}', space=vmem, size = 0x8000, scoped, tag = 'output window, operand 0, single buffered']
    // Predicated region
    $region2: #{_mlp_forward_2d.1} parent=1 // pred_check
      _
    $region3: #{_mlp_forward_2d.1} parent=1 // pred_check_branch
      %13 = sbr.rel (0) target = $region5
    $region4: #{_mlp_forward_2d.1} parent=1 // pred_region
      _
    $region5: #{_mlp_forward_2d.1} parent=1 // pred_fallthru
      _
    // Predicated region
    $region6: #{_mlp_forward_2d.1} parent=1 // pred_check
      _
    $region7: #{_mlp_forward_2d.1} parent=1 // pred_check_branch
      %15 = sbr.rel (0) target = $region9
    $region8: #{_mlp_forward_2d.1} parent=1 // pred_region
      _
    $region9: #{_mlp_forward_2d.1} parent=1 // pred_fallthru
      _
    // Predicated region
    $region10: #{_mlp_forward_2d.1} parent=1 // pred_check
      _
    $region11: #{_mlp_forward_2d.1} parent=1 // pred_check_branch
      %17 = sbr.rel (0) target = $region13
    $region12: #{_mlp_forward_2d.1} parent=1 // pred_region
      _
    $region13: #{_mlp_forward_2d.1} parent=1 // pred_fallthru
      _
    // Predicated region
    $region14: #{_mlp_forward_2d.1} parent=1 // pred_check
      _
    $region15: #{_mlp_forward_2d.1} parent=1 // pred_check_branch
      %19 = sbr.rel (0) target = $region17
    $region16: #{_mlp_forward_2d.1} parent=1 // pred_region
      _
    $region17: #{_mlp_forward_2d.1} parent=1 // pred_fallthru
      _
    // Predicated region
    $region18: #{_mlp_forward_2d.1} parent=1 // pred_check
      _
    $region19: #{_mlp_forward_2d.1} parent=1 // pred_check_branch
      %21 = sbr.rel (0) target = $region21
    $region20: #{_mlp_forward_2d.1} parent=1 // pred_region
      _
    $region21: #{_mlp_forward_2d.1} parent=1 // pred_fallthru
      _
    // Predicated region
    $region22: #{_mlp_forward_2d.1} parent=1 // pred_check
      _
    $region23: #{_mlp_forward_2d.1} parent=1 // pred_check_branch
      %23 = sbr.rel (0) target = $region25
    $region24: #{_mlp_forward_2d.1} parent=1 // pred_region
      _
    $region25: #{_mlp_forward_2d.1} parent=1 // pred_fallthru
      _
    // Predicated region
    $region26: #{_mlp_forward_2d.1} parent=1 // pred_check
      _
    $region27: #{_mlp_forward_2d.1} parent=1 // pred_check_branch
      %25 = sbr.rel (0) target = $region29
    $region28: #{_mlp_forward_2d.1} parent=1 // pred_region
      _
    $region29: #{_mlp_forward_2d.1} parent=1 // pred_fallthru
      _
    %v26 = vld [vmem:[%s0] sm:$0xff]
    %v27 = vld [vmem:[%s0 + $0x8] sm:$0xff]
    %v28 = vld [vmem:[%s0 + $0x10] sm:$0xff]
    %v29 = vld [vmem:[%s0 + $0x18] sm:$0xff]
    %v30 = vld [vmem:[%s0 + $0x20] sm:$0xff]
    %v31 = vld [vmem:[%s0 + $0x28] sm:$0xff]
    %v32 = vld [vmem:[%s0 + $0x30] sm:$0xff]
    %v33 = vld [vmem:[%s0 + $0x38] sm:$0xff]
    %v34 = vld [vmem:[%s0 + $0x40] sm:$0xff]
    %v35 = vld [vmem:[%s0 + $0x48] sm:$0xff]
    %v36 = vld [vmem:[%s0 + $0x50] sm:$0xff]
    %v37 = vld [vmem:[%s0 + $0x58] sm:$0xff]
    %v38 = vld [vmem:[%s0 + $0x60] sm:$0xff]
    %v39 = vld [vmem:[%s0 + $0x68] sm:$0xff]
    %v40 = vld [vmem:[%s0 + $0x70] sm:$0xff]
    %v41 = vld [vmem:[%s0 + $0x78] sm:$0xff]
    %v42 = vld [vmem:[%s0 + $0x80] sm:$0xff]
    %v43 = vld [vmem:[%s0 + $0x88] sm:$0xff]
    %v44 = vld [vmem:[%s0 + $0x90] sm:$0xff]
    %v45 = vld [vmem:[%s0 + $0x98] sm:$0xff]
    %v46 = vld [vmem:[%s0 + $0xa0] sm:$0xff]
    %v47 = vld [vmem:[%s0 + $0xa8] sm:$0xff]
    %v48 = vld [vmem:[%s0 + $0xb0] sm:$0xff]
    %v49 = vld [vmem:[%s0 + $0xb8] sm:$0xff]
    %v50 = vld [vmem:[%s0 + $0xc0] sm:$0xff]
    %v51 = vld [vmem:[%s0 + $0xc8] sm:$0xff]
    %v52 = vld [vmem:[%s0 + $0xd0] sm:$0xff]
    %v53 = vld [vmem:[%s0 + $0xd8] sm:$0xff]
    %v54 = vld [vmem:[%s0 + $0xe0] sm:$0xff]
    %v55 = vld [vmem:[%s0 + $0xe8] sm:$0xff]
    %v56 = vld [vmem:[%s0 + $0xf0] sm:$0xff]
    %v57 = vld [vmem:[%s0 + $0xf8] sm:$0xff]
    %v58 = vld [vmem:[%s0 + $0x100] sm:$0xff]
    %v59 = vld [vmem:[%s0 + $0x108] sm:$0xff]
    %v60 = vld [vmem:[%s0 + $0x110] sm:$0xff]
    %v61 = vld [vmem:[%s0 + $0x118] sm:$0xff]
    %v62 = vld [vmem:[%s0 + $0x120] sm:$0xff]
    %v63 = vld [vmem:[%s0 + $0x128] sm:$0xff]
    %v64 = vld [vmem:[%s0 + $0x130] sm:$0xff]
    %v65 = vld [vmem:[%s0 + $0x138] sm:$0xff]
    %v66 = vld [vmem:[%s0 + $0x140] sm:$0xff]
    %v67 = vld [vmem:[%s0 + $0x148] sm:$0xff]
    %v68 = vld [vmem:[%s0 + $0x150] sm:$0xff]
    %v69 = vld [vmem:[%s0 + $0x158] sm:$0xff]
    %v70 = vld [vmem:[%s0 + $0x160] sm:$0xff]
    %v71 = vld [vmem:[%s0 + $0x168] sm:$0xff]
    %v72 = vld [vmem:[%s0 + $0x170] sm:$0xff]
    %v73 = vld [vmem:[%s0 + $0x178] sm:$0xff]
    %v74 = vld [vmem:[%s0 + $0x180] sm:$0xff]
    %v75 = vld [vmem:[%s0 + $0x188] sm:$0xff]
    %v76 = vld [vmem:[%s0 + $0x190] sm:$0xff]
    %v77 = vld [vmem:[%s0 + $0x198] sm:$0xff]
    %v78 = vld [vmem:[%s0 + $0x1a0] sm:$0xff]
    %v79 = vld [vmem:[%s0 + $0x1a8] sm:$0xff]
    %v80 = vld [vmem:[%s0 + $0x1b0] sm:$0xff]
    %v81 = vld [vmem:[%s0 + $0x1b8] sm:$0xff]
    %v82 = vld [vmem:[%s0 + $0x1c0] sm:$0xff]
    %v83 = vld [vmem:[%s0 + $0x1c8] sm:$0xff]
    %v84 = vld [vmem:[%s0 + $0x1d0] sm:$0xff]
    %v85 = vld [vmem:[%s0 + $0x1d8] sm:$0xff]
    %v86 = vld [vmem:[%s0 + $0x1e0] sm:$0xff]
    %v87 = vld [vmem:[%s0 + $0x1e8] sm:$0xff]
    %v88 = vld [vmem:[%s0 + $0x1f0] sm:$0xff]
    %v89 = vld [vmem:[%s0 + $0x1f8] sm:$0xff]
    %v90 = vld [vmem:[%s0 + $0x200] sm:$0xff]
    %v91 = vld [vmem:[%s0 + $0x208] sm:$0xff]
    %v92 = vld [vmem:[%s0 + $0x210] sm:$0xff]
    %v93 = vld [vmem:[%s0 + $0x218] sm:$0xff]
    %v94 = vld [vmem:[%s0 + $0x220] sm:$0xff]
    %v95 = vld [vmem:[%s0 + $0x228] sm:$0xff]
    %v96 = vld [vmem:[%s0 + $0x230] sm:$0xff]
    %v97 = vld [vmem:[%s0 + $0x238] sm:$0xff]
    %v98 = vld [vmem:[%s0 + $0x240] sm:$0xff]
    %v99 = vld [vmem:[%s0 + $0x248] sm:$0xff]
    %v100 = vld [vmem:[%s0 + $0x250] sm:$0xff]
    %v101 = vld [vmem:[%s0 + $0x258] sm:$0xff]
    %v102 = vld [vmem:[%s0 + $0x260] sm:$0xff]
    %v103 = vld [vmem:[%s0 + $0x268] sm:$0xff]
    %v104 = vld [vmem:[%s0 + $0x270] sm:$0xff]
    %v105 = vld [vmem:[%s0 + $0x278] sm:$0xff]
    %v106 = vld [vmem:[%s0 + $0x280] sm:$0xff]
    %v107 = vld [vmem:[%s0 + $0x288] sm:$0xff]
    %v108 = vld [vmem:[%s0 + $0x290] sm:$0xff]
    %v109 = vld [vmem:[%s0 + $0x298] sm:$0xff]
    %v110 = vld [vmem:[%s0 + $0x2a0] sm:$0xff]
    %v111 = vld [vmem:[%s0 + $0x2a8] sm:$0xff]
    %v112 = vld [vmem:[%s0 + $0x2b0] sm:$0xff]
    %v113 = vld [vmem:[%s0 + $0x2b8] sm:$0xff]
    %v114 = vld [vmem:[%s0 + $0x2c0] sm:$0xff]
    %v115 = vld [vmem:[%s0 + $0x2c8] sm:$0xff]
    %v116 = vld [vmem:[%s0 + $0x2d0] sm:$0xff]
    %v117 = vld [vmem:[%s0 + $0x2d8] sm:$0xff]
    %v118 = vld [vmem:[%s0 + $0x2e0] sm:$0xff]
    %v119 = vld [vmem:[%s0 + $0x2e8] sm:$0xff]
    %v120 = vld [vmem:[%s0 + $0x2f0] sm:$0xff]
    %v121 = vld [vmem:[%s0 + $0x2f8] sm:$0xff]
    %v122 = vld [vmem:[%s0 + $0x300] sm:$0xff]
    %v123 = vld [vmem:[%s0 + $0x308] sm:$0xff]
    %v124 = vld [vmem:[%s0 + $0x310] sm:$0xff]
    %v125 = vld [vmem:[%s0 + $0x318] sm:$0xff]
    %v126 = vld [vmem:[%s0 + $0x320] sm:$0xff]
    %v127 = vld [vmem:[%s0 + $0x328] sm:$0xff]
    %v128 = vld [vmem:[%s0 + $0x330] sm:$0xff]
    %v129 = vld [vmem:[%s0 + $0x338] sm:$0xff]
    %v130 = vld [vmem:[%s0 + $0x340] sm:$0xff]
    %v131 = vld [vmem:[%s0 + $0x348] sm:$0xff]
    %v132 = vld [vmem:[%s0 + $0x350] sm:$0xff]
    %v133 = vld [vmem:[%s0 + $0x358] sm:$0xff]
    %v134 = vld [vmem:[%s0 + $0x360] sm:$0xff]
    %v135 = vld [vmem:[%s0 + $0x368] sm:$0xff]
    %v136 = vld [vmem:[%s0 + $0x370] sm:$0xff]
    %v137 = vld [vmem:[%s0 + $0x378] sm:$0xff]
    %v138 = vld [vmem:[%s0 + $0x380] sm:$0xff]
    %v139 = vld [vmem:[%s0 + $0x388] sm:$0xff]
    %v140 = vld [vmem:[%s0 + $0x390] sm:$0xff]
    %v141 = vld [vmem:[%s0 + $0x398] sm:$0xff]
    %v142 = vld [vmem:[%s0 + $0x3a0] sm:$0xff]
    %v143 = vld [vmem:[%s0 + $0x3a8] sm:$0xff]
    %v144 = vld [vmem:[%s0 + $0x3b0] sm:$0xff]
    %v145 = vld [vmem:[%s0 + $0x3b8] sm:$0xff]
    %v146 = vld [vmem:[%s0 + $0x3c0] sm:$0xff]
    %v147 = vld [vmem:[%s0 + $0x3c8] sm:$0xff]
    %v148 = vld [vmem:[%s0 + $0x3d0] sm:$0xff]
    %v149 = vld [vmem:[%s0 + $0x3d8] sm:$0xff]
    %v150 = vld [vmem:[%s0 + $0x3e0] sm:$0xff]
    %v151 = vld [vmem:[%s0 + $0x3e8] sm:$0xff]
    %v152 = vld [vmem:[%s0 + $0x3f0] sm:$0xff]
    %v153 = vld [vmem:[%s0 + $0x3f8] sm:$0xff]
    %282 = vst [vmem:[#allocation1] ss:$4 sm:$0xff] %v26
    %s283 = scalar_lea.vmem [#allocation1], 1
    %284 = vst [vmem:[%s283] ss:$4 sm:$0xff] %v28
    %s285 = scalar_lea.vmem [#allocation1], 2
    %286 = vst [vmem:[%s285] ss:$4 sm:$0xff] %v30
    %s287 = scalar_lea.vmem [#allocation1], 3
    %288 = vst [vmem:[%s287] ss:$4 sm:$0xff] %v32
    %s289 = scalar_lea.vmem [#allocation1], 32
    %290 = vst [vmem:[%s289] ss:$4 sm:$0xff] %v27
    %s291 = scalar_lea.vmem [#allocation1], 33
    %292 = vst [vmem:[%s291] ss:$4 sm:$0xff] %v29
    %s293 = scalar_lea.vmem [#allocation1], 34
    %294 = vst [vmem:[%s293] ss:$4 sm:$0xff] %v31
    %s295 = scalar_lea.vmem [#allocation1], 35
    %296 = vst [vmem:[%s295] ss:$4 sm:$0xff] %v33
    %v297 = vld.sshfl [vmem:[#allocation1] sm:$0xff pattern:$0x73625140]
    %v298 = vld.sshfl [vmem:[#allocation1 + $0x8] sm:$0xff pattern:$0x73625140]
    %v299 = vld.sshfl [vmem:[#allocation1 + $0x10] sm:$0xff pattern:$0x73625140]
    %v300 = vld.sshfl [vmem:[#allocation1 + $0x18] sm:$0xff pattern:$0x73625140]
    %v301 = vld.sshfl [vmem:[#allocation1 + $0x20] sm:$0xff pattern:$0x73625140]
    %v302 = vld.sshfl [vmem:[#allocation1 + $0x28] sm:$0xff pattern:$0x73625140]
    %v303 = vld.sshfl [vmem:[#allocation1 + $0x30] sm:$0xff pattern:$0x73625140]
    %v304 = vld.sshfl [vmem:[#allocation1 + $0x38] sm:$0xff pattern:$0x73625140]
    %305 = vst [vmem:[#allocation1] ss:$4 sm:$0xff] %v34
    %306 = vst [vmem:[%s283] ss:$4 sm:$0xff] %v36
    %307 = vst [vmem:[%s285] ss:$4 sm:$0xff] %v38
    %308 = vst [vmem:[%s287] ss:$4 sm:$0xff] %v40
    %309 = vst [vmem:[%s289] ss:$4 sm:$0xff] %v35
    %310 = vst [vmem:[%s291] ss:$4 sm:$0xff] %v37
    %311 = vst [vmem:[%s293] ss:$4 sm:$0xff] %v39
    %312 = vst [vmem:[%s295] ss:$4 sm:$0xff] %v41
    %v313 = vld.sshfl [vmem:[#allocation1] sm:$0xff pattern:$0x73625140]
    %v314 = vld.sshfl [vmem:[#allocation1 + $0x8] sm:$0xff pattern:$0x73625140]
    %v315 = vld.sshfl [vmem:[#allocation1 + $0x10] sm:$0xff pattern:$0x73625140]
    %v316 = vld.sshfl [vmem:[#allocation1 + $0x18] sm:$0xff pattern:$0x73625140]
    %v317 = vld.sshfl [vmem:[#allocation1 + $0x20] sm:$0xff pattern:$0x73625140]
    %v318 = vld.sshfl [vmem:[#allocation1 + $0x28] sm:$0xff pattern:$0x73625140]
    %v319 = vld.sshfl [vmem:[#allocation1 + $0x30] sm:$0xff pattern:$0x73625140]
    %v320 = vld.sshfl [vmem:[#allocation1 + $0x38] sm:$0xff pattern:$0x73625140]
    %321 = vst [vmem:[#allocation1] ss:$4 sm:$0xff] %v42
    %322 = vst [vmem:[%s283] ss:$4 sm:$0xff] %v44
    %323 = vst [vmem:[%s285] ss:$4 sm:$0xff] %v46
    %324 = vst [vmem:[%s287] ss:$4 sm:$0xff] %v48
    %325 = vst [vmem:[%s289] ss:$4 sm:$0xff] %v43
    %326 = vst [vmem:[%s291] ss:$4 sm:$0xff] %v45
    %327 = vst [vmem:[%s293] ss:$4 sm:$0xff] %v47
    %328 = vst [vmem:[%s295] ss:$4 sm:$0xff] %v49
    %v329 = vld.sshfl [vmem:[#allocation1] sm:$0xff pattern:$0x73625140]
    %v330 = vld.sshfl [vmem:[#allocation1 + $0x8] sm:$0xff pattern:$0x73625140]
    %v331 = vld.sshfl [vmem:[#allocation1 + $0x10] sm:$0xff pattern:$0x73625140]
    %v332 = vld.sshfl [vmem:[#allocation1 + $0x18] sm:$0xff pattern:$0x73625140]
    %v333 = vld.sshfl [vmem:[#allocation1 + $0x20] sm:$0xff pattern:$0x73625140]
    %v334 = vld.sshfl [vmem:[#allocation1 + $0x28] sm:$0xff pattern:$0x73625140]
    %v335 = vld.sshfl [vmem:[#allocation1 + $0x30] sm:$0xff pattern:$0x73625140]
    %v336 = vld.sshfl [vmem:[#allocation1 + $0x38] sm:$0xff pattern:$0x73625140]
    %337 = vst [vmem:[#allocation1] ss:$4 sm:$0xff] %v50
    %338 = vst [vmem:[%s283] ss:$4 sm:$0xff] %v52
    %339 = vst [vmem:[%s285] ss:$4 sm:$0xff] %v54
    %340 = vst [vmem:[%s287] ss:$4 sm:$0xff] %v56
    %341 = vst [vmem:[%s289] ss:$4 sm:$0xff] %v51
    %342 = vst [vmem:[%s291] ss:$4 sm:$0xff] %v53
    %343 = vst [vmem:[%s293] ss:$4 sm:$0xff] %v55
    %344 = vst [vmem:[%s295] ss:$4 sm:$0xff] %v57
    %v345 = vld.sshfl [vmem:[#allocation1] sm:$0xff pattern:$0x73625140]
    %v346 = vld.sshfl [vmem:[#allocation1 + $0x8] sm:$0xff pattern:$0x73625140]
    %v347 = vld.sshfl [vmem:[#allocation1 + $0x10] sm:$0xff pattern:$0x73625140]
    %v348 = vld.sshfl [vmem:[#allocation1 + $0x18] sm:$0xff pattern:$0x73625140]
    %v349 = vld.sshfl [vmem:[#allocation1 + $0x20] sm:$0xff pattern:$0x73625140]
    %v350 = vld.sshfl [vmem:[#allocation1 + $0x28] sm:$0xff pattern:$0x73625140]
    %v351 = vld.sshfl [vmem:[#allocation1 + $0x30] sm:$0xff pattern:$0x73625140]
    %v352 = vld.sshfl [vmem:[#allocation1 + $0x38] sm:$0xff pattern:$0x73625140]
    %353 = vst [vmem:[#allocation1] ss:$4 sm:$0xff] %v58
    %354 = vst [vmem:[%s283] ss:$4 sm:$0xff] %v60
    %355 = vst [vmem:[%s285] ss:$4 sm:$0xff] %v62
    %356 = vst [vmem:[%s287] ss:$4 sm:$0xff] %v64
    %357 = vst [vmem:[%s289] ss:$4 sm:$0xff] %v59
    %358 = vst [vmem:[%s291] ss:$4 sm:$0xff] %v61
    %359 = vst [vmem:[%s293] ss:$4 sm:$0xff] %v63
    %360 = vst [vmem:[%s295] ss:$4 sm:$0xff] %v65
    %v361 = vld.sshfl [vmem:[#allocation1] sm:$0xff pattern:$0x73625140]
    %v362 = vld.sshfl [vmem:[#allocation1 + $0x8] sm:$0xff pattern:$0x73625140]
    %v363 = vld.sshfl [vmem:[#allocation1 + $0x10] sm:$0xff pattern:$0x73625140]
    %v364 = vld.sshfl [vmem:[#allocation1 + $0x18] sm:$0xff pattern:$0x73625140]
    %v365 = vld.sshfl [vmem:[#allocation1 + $0x20] sm:$0xff pattern:$0x73625140]
    %v366 = vld.sshfl [vmem:[#allocation1 + $0x28] sm:$0xff pattern:$0x73625140]
    %v367 = vld.sshfl [vmem:[#allocation1 + $0x30] sm:$0xff pattern:$0x73625140]
    %v368 = vld.sshfl [vmem:[#allocation1 + $0x38] sm:$0xff pattern:$0x73625140]
    %369 = vst [vmem:[#allocation1] ss:$4 sm:$0xff] %v66
    %370 = vst [vmem:[%s283] ss:$4 sm:$0xff] %v68
    %371 = vst [vmem:[%s285] ss:$4 sm:$0xff] %v70
    %372 = vst [vmem:[%s287] ss:$4 sm:$0xff] %v72
    %373 = vst [vmem:[%s289] ss:$4 sm:$0xff] %v67
    %374 = vst [vmem:[%s291] ss:$4 sm:$0xff] %v69
    %375 = vst [vmem:[%s293] ss:$4 sm:$0xff] %v71
    %376 = vst [vmem:[%s295] ss:$4 sm:$0xff] %v73
    %v377 = vld.sshfl [vmem:[#allocation1] sm:$0xff pattern:$0x73625140]
    %v378 = vld.sshfl [vmem:[#allocation1 + $0x8] sm:$0xff pattern:$0x73625140]
    %v379 = vld.sshfl [vmem:[#allocation1 + $0x10] sm:$0xff pattern:$0x73625140]
    %v380 = vld.sshfl [vmem:[#allocation1 + $0x18] sm:$0xff pattern:$0x73625140]
    %v381 = vld.sshfl [vmem:[#allocation1 + $0x20] sm:$0xff pattern:$0x73625140]
    %v382 = vld.sshfl [vmem:[#allocation1 + $0x28] sm:$0xff pattern:$0x73625140]
    %v383 = vld.sshfl [vmem:[#allocation1 + $0x30] sm:$0xff pattern:$0x73625140]
    %v384 = vld.sshfl [vmem:[#allocation1 + $0x38] sm:$0xff pattern:$0x73625140]
    %385 = vst [vmem:[#allocation1] ss:$4 sm:$0xff] %v74
    %386 = vst [vmem:[%s283] ss:$4 sm:$0xff] %v76
    %387 = vst [vmem:[%s285] ss:$4 sm:$0xff] %v78
    %388 = vst [vmem:[%s287] ss:$4 sm:$0xff] %v80
    %389 = vst [vmem:[%s289] ss:$4 sm:$0xff] %v75
    %390 = vst [vmem:[%s291] ss:$4 sm:$0xff] %v77
    %391 = vst [vmem:[%s293] ss:$4 sm:$0xff] %v79
    %392 = vst [vmem:[%s295] ss:$4 sm:$0xff] %v81
    %v393 = vld.sshfl [vmem:[#allocation1] sm:$0xff pattern:$0x73625140]
    %v394 = vld.sshfl [vmem:[#allocation1 + $0x8] sm:$0xff pattern:$0x73625140]
    %v395 = vld.sshfl [vmem:[#allocation1 + $0x10] sm:$0xff pattern:$0x73625140]
    %v396 = vld.sshfl [vmem:[#allocation1 + $0x18] sm:$0xff pattern:$0x73625140]
    %v397 = vld.sshfl [vmem:[#allocation1 + $0x20] sm:$0xff pattern:$0x73625140]
    %v398 = vld.sshfl [vmem:[#allocation1 + $0x28] sm:$0xff pattern:$0x73625140]
    %v399 = vld.sshfl [vmem:[#allocation1 + $0x30] sm:$0xff pattern:$0x73625140]
    %v400 = vld.sshfl [vmem:[#allocation1 + $0x38] sm:$0xff pattern:$0x73625140]
    %401 = vst [vmem:[#allocation1] ss:$4 sm:$0xff] %v82
    %402 = vst [vmem:[%s283] ss:$4 sm:$0xff] %v84
    %403 = vst [vmem:[%s285] ss:$4 sm:$0xff] %v86
    %404 = vst [vmem:[%s287] ss:$4 sm:$0xff] %v88
    %405 = vst [vmem:[%s289] ss:$4 sm:$0xff] %v83
    %406 = vst [vmem:[%s291] ss:$4 sm:$0xff] %v85
    %407 = vst [vmem:[%s293] ss:$4 sm:$0xff] %v87
    %408 = vst [vmem:[%s295] ss:$4 sm:$0xff] %v89
    %v409 = vld.sshfl [vmem:[#allocation1] sm:$0xff pattern:$0x73625140]
    %v410 = vld.sshfl [vmem:[#allocation1 + $0x8] sm:$0xff pattern:$0x73625140]
    %v411 = vld.sshfl [vmem:[#allocation1 + $0x10] sm:$0xff pattern:$0x73625140]
    %v412 = vld.sshfl [vmem:[#allocation1 + $0x18] sm:$0xff pattern:$0x73625140]
    %v413 = vld.sshfl [vmem:[#allocation1 + $0x20] sm:$0xff pattern:$0x73625140]
    %v414 = vld.sshfl [vmem:[#allocation1 + $0x28] sm:$0xff pattern:$0x73625140]
    %v415 = vld.sshfl [vmem:[#allocation1 + $0x30] sm:$0xff pattern:$0x73625140]
    %v416 = vld.sshfl [vmem:[#allocation1 + $0x38] sm:$0xff pattern:$0x73625140]
    %417 = vst [vmem:[#allocation1] ss:$4 sm:$0xff] %v90
    %418 = vst [vmem:[%s283] ss:$4 sm:$0xff] %v92
    %419 = vst [vmem:[%s285] ss:$4 sm:$0xff] %v94
    %420 = vst [vmem:[%s287] ss:$4 sm:$0xff] %v96
    %421 = vst [vmem:[%s289] ss:$4 sm:$0xff] %v91
    %422 = vst [vmem:[%s291] ss:$4 sm:$0xff] %v93
    %423 = vst [vmem:[%s293] ss:$4 sm:$0xff] %v95
    %424 = vst [vmem:[%s295] ss:$4 sm:$0xff] %v97
    %v425 = vld.sshfl [vmem:[#allocation1] sm:$0xff pattern:$0x73625140]
    %v426 = vld.sshfl [vmem:[#allocation1 + $0x8] sm:$0xff pattern:$0x73625140]
    %v427 = vld.sshfl [vmem:[#allocation1 + $0x10] sm:$0xff pattern:$0x73625140]
    %v428 = vld.sshfl [vmem:[#allocation1 + $0x18] sm:$0xff pattern:$0x73625140]
    %v429 = vld.sshfl [vmem:[#allocation1 + $0x20] sm:$0xff pattern:$0x73625140]
    %v430 = vld.sshfl [vmem:[#allocation1 + $0x28] sm:$0xff pattern:$0x73625140]
    %v431 = vld.sshfl [vmem:[#allocation1 + $0x30] sm:$0xff pattern:$0x73625140]
    %v432 = vld.sshfl [vmem:[#allocation1 + $0x38] sm:$0xff pattern:$0x73625140]
    %433 = vst [vmem:[#allocation1] ss:$4 sm:$0xff] %v98
    %434 = vst [vmem:[%s283] ss:$4 sm:$0xff] %v100
    %435 = vst [vmem:[%s285] ss:$4 sm:$0xff] %v102
    %436 = vst [vmem:[%s287] ss:$4 sm:$0xff] %v104
    %437 = vst [vmem:[%s289] ss:$4 sm:$0xff] %v99
    %438 = vst [vmem:[%s291] ss:$4 sm:$0xff] %v101
    %439 = vst [vmem:[%s293] ss:$4 sm:$0xff] %v103
    %440 = vst [vmem:[%s295] ss:$4 sm:$0xff] %v105
    %v441 = vld.sshfl [vmem:[#allocation1] sm:$0xff pattern:$0x73625140]
    %v442 = vld.sshfl [vmem:[#allocation1 + $0x8] sm:$0xff pattern:$0x73625140]
    %v443 = vld.sshfl [vmem:[#allocation1 + $0x10] sm:$0xff pattern:$0x73625140]
    %v444 = vld.sshfl [vmem:[#allocation1 + $0x18] sm:$0xff pattern:$0x73625140]
    %v445 = vld.sshfl [vmem:[#allocation1 + $0x20] sm:$0xff pattern:$0x73625140]
    %v446 = vld.sshfl [vmem:[#allocation1 + $0x28] sm:$0xff pattern:$0x73625140]
    %v447 = vld.sshfl [vmem:[#allocation1 + $0x30] sm:$0xff pattern:$0x73625140]
    %v448 = vld.sshfl [vmem:[#allocation1 + $0x38] sm:$0xff pattern:$0x73625140]
    %449 = vst [vmem:[#allocation1] ss:$4 sm:$0xff] %v106
    %450 = vst [vmem:[%s283] ss:$4 sm:$0xff] %v108
    %451 = vst [vmem:[%s285] ss:$4 sm:$0xff] %v110
    %452 = vst [vmem:[%s287] ss:$4 sm:$0xff] %v112
    %453 = vst [vmem:[%s289] ss:$4 sm:$0xff] %v107
    %454 = vst [vmem:[%s291] ss:$4 sm:$0xff] %v109
    %455 = vst [vmem:[%s293] ss:$4 sm:$0xff] %v111
    %456 = vst [vmem:[%s295] ss:$4 sm:$0xff] %v113
    %v457 = vld.sshfl [vmem:[#allocation1] sm:$0xff pattern:$0x73625140]
    %v458 = vld.sshfl [vmem:[#allocation1 + $0x8] sm:$0xff pattern:$0x73625140]
    %v459 = vld.sshfl [vmem:[#allocation1 + $0x10] sm:$0xff pattern:$0x73625140]
    %v460 = vld.sshfl [vmem:[#allocation1 + $0x18] sm:$0xff pattern:$0x73625140]
    %v461 = vld.sshfl [vmem:[#allocation1 + $0x20] sm:$0xff pattern:$0x73625140]
    %v462 = vld.sshfl [vmem:[#allocation1 + $0x28] sm:$0xff pattern:$0x73625140]
    %v463 = vld.sshfl [vmem:[#allocation1 + $0x30] sm:$0xff pattern:$0x73625140]
    %v464 = vld.sshfl [vmem:[#allocation1 + $0x38] sm:$0xff pattern:$0x73625140]
    %465 = vst [vmem:[#allocation1] ss:$4 sm:$0xff] %v114
    %466 = vst [vmem:[%s283] ss:$4 sm:$0xff] %v116
    %467 = vst [vmem:[%s285] ss:$4 sm:$0xff] %v118
    %468 = vst [vmem:[%s287] ss:$4 sm:$0xff] %v120
    %469 = vst [vmem:[%s289] ss:$4 sm:$0xff] %v115
    %470 = vst [vmem:[%s291] ss:$4 sm:$0xff] %v117
    %471 = vst [vmem:[%s293] ss:$4 sm:$0xff] %v119
    %472 = vst [vmem:[%s295] ss:$4 sm:$0xff] %v121
    %v473 = vld.sshfl [vmem:[#allocation1] sm:$0xff pattern:$0x73625140]
    %v474 = vld.sshfl [vmem:[#allocation1 + $0x8] sm:$0xff pattern:$0x73625140]
    %v475 = vld.sshfl [vmem:[#allocation1 + $0x10] sm:$0xff pattern:$0x73625140]
    %v476 = vld.sshfl [vmem:[#allocation1 + $0x18] sm:$0xff pattern:$0x73625140]
    %v477 = vld.sshfl [vmem:[#allocation1 + $0x20] sm:$0xff pattern:$0x73625140]
    %v478 = vld.sshfl [vmem:[#allocation1 + $0x28] sm:$0xff pattern:$0x73625140]
    %v479 = vld.sshfl [vmem:[#allocation1 + $0x30] sm:$0xff pattern:$0x73625140]
    %v480 = vld.sshfl [vmem:[#allocation1 + $0x38] sm:$0xff pattern:$0x73625140]
    %481 = vst [vmem:[#allocation1] ss:$4 sm:$0xff] %v122
    %482 = vst [vmem:[%s283] ss:$4 sm:$0xff] %v124
    %483 = vst [vmem:[%s285] ss:$4 sm:$0xff] %v126
    %484 = vst [vmem:[%s287] ss:$4 sm:$0xff] %v128
    %485 = vst [vmem:[%s289] ss:$4 sm:$0xff] %v123
    %486 = vst [vmem:[%s291] ss:$4 sm:$0xff] %v125
    %487 = vst [vmem:[%s293] ss:$4 sm:$0xff] %v127
    %488 = vst [vmem:[%s295] ss:$4 sm:$0xff] %v129
    %v489 = vld.sshfl [vmem:[#allocation1] sm:$0xff pattern:$0x73625140]
    %v490 = vld.sshfl [vmem:[#allocation1 + $0x8] sm:$0xff pattern:$0x73625140]
    %v491 = vld.sshfl [vmem:[#allocation1 + $0x10] sm:$0xff pattern:$0x73625140]
    %v492 = vld.sshfl [vmem:[#allocation1 + $0x18] sm:$0xff pattern:$0x73625140]
    %v493 = vld.sshfl [vmem:[#allocation1 + $0x20] sm:$0xff pattern:$0x73625140]
    %v494 = vld.sshfl [vmem:[#allocation1 + $0x28] sm:$0xff pattern:$0x73625140]
    %v495 = vld.sshfl [vmem:[#allocation1 + $0x30] sm:$0xff pattern:$0x73625140]
    %v496 = vld.sshfl [vmem:[#allocation1 + $0x38] sm:$0xff pattern:$0x73625140]
    %497 = vst [vmem:[#allocation1] ss:$4 sm:$0xff] %v130
    %498 = vst [vmem:[%s283] ss:$4 sm:$0xff] %v132
    %499 = vst [vmem:[%s285] ss:$4 sm:$0xff] %v134
    %500 = vst [vmem:[%s287] ss:$4 sm:$0xff] %v136
    %501 = vst [vmem:[%s289] ss:$4 sm:$0xff] %v131
    %502 = vst [vmem:[%s291] ss:$4 sm:$0xff] %v133
    %503 = vst [vmem:[%s293] ss:$4 sm:$0xff] %v135
    %504 = vst [vmem:[%s295] ss:$4 sm:$0xff] %v137
    %v505 = vld.sshfl [vmem:[#allocation1] sm:$0xff pattern:$0x73625140]
    %v506 = vld.sshfl [vmem:[#allocation1 + $0x8] sm:$0xff pattern:$0x73625140]
    %v507 = vld.sshfl [vmem:[#allocation1 + $0x10] sm:$0xff pattern:$0x73625140]
    %v508 = vld.sshfl [vmem:[#allocation1 + $0x18] sm:$0xff pattern:$0x73625140]
    %v509 = vld.sshfl [vmem:[#allocation1 + $0x20] sm:$0xff pattern:$0x73625140]
    %v510 = vld.sshfl [vmem:[#allocation1 + $0x28] sm:$0xff pattern:$0x73625140]
    %v511 = vld.sshfl [vmem:[#allocation1 + $0x30] sm:$0xff pattern:$0x73625140]
    %v512 = vld.sshfl [vmem:[#allocation1 + $0x38] sm:$0xff pattern:$0x73625140]
    %513 = vst [vmem:[#allocation1] ss:$4 sm:$0xff] %v138
    %514 = vst [vmem:[%s283] ss:$4 sm:$0xff] %v140
    %515 = vst [vmem:[%s285] ss:$4 sm:$0xff] %v142
    %516 = vst [vmem:[%s287] ss:$4 sm:$0xff] %v144
    %517 = vst [vmem:[%s289] ss:$4 sm:$0xff] %v139
    %518 = vst [vmem:[%s291] ss:$4 sm:$0xff] %v141
    %519 = vst [vmem:[%s293] ss:$4 sm:$0xff] %v143
    %520 = vst [vmem:[%s295] ss:$4 sm:$0xff] %v145
    %v521 = vld.sshfl [vmem:[#allocation1] sm:$0xff pattern:$0x73625140]
    %v522 = vld.sshfl [vmem:[#allocation1 + $0x8] sm:$0xff pattern:$0x73625140]
    %v523 = vld.sshfl [vmem:[#allocation1 + $0x10] sm:$0xff pattern:$0x73625140]
    %v524 = vld.sshfl [vmem:[#allocation1 + $0x18] sm:$0xff pattern:$0x73625140]
    %v525 = vld.sshfl [vmem:[#allocation1 + $0x20] sm:$0xff pattern:$0x73625140]
    %v526 = vld.sshfl [vmem:[#allocation1 + $0x28] sm:$0xff pattern:$0x73625140]
    %v527 = vld.sshfl [vmem:[#allocation1 + $0x30] sm:$0xff pattern:$0x73625140]
    %v528 = vld.sshfl [vmem:[#allocation1 + $0x38] sm:$0xff pattern:$0x73625140]
    %529 = vst [vmem:[#allocation1] ss:$4 sm:$0xff] %v146
    %530 = vst [vmem:[%s283] ss:$4 sm:$0xff] %v148
    %531 = vst [vmem:[%s285] ss:$4 sm:$0xff] %v150
    %532 = vst [vmem:[%s287] ss:$4 sm:$0xff] %v152
    %533 = vst [vmem:[%s289] ss:$4 sm:$0xff] %v147
    %534 = vst [vmem:[%s291] ss:$4 sm:$0xff] %v149
    %535 = vst [vmem:[%s293] ss:$4 sm:$0xff] %v151
    %536 = vst [vmem:[%s295] ss:$4 sm:$0xff] %v153
    %v537 = vld.sshfl [vmem:[#allocation1] sm:$0xff pattern:$0x73625140]
    %v538 = vld.sshfl [vmem:[#allocation1 + $0x8] sm:$0xff pattern:$0x73625140]
    %v539 = vld.sshfl [vmem:[#allocation1 + $0x10] sm:$0xff pattern:$0x73625140]
    %v540 = vld.sshfl [vmem:[#allocation1 + $0x18] sm:$0xff pattern:$0x73625140]
    %v541 = vld.sshfl [vmem:[#allocation1 + $0x20] sm:$0xff pattern:$0x73625140]
    %v542 = vld.sshfl [vmem:[#allocation1 + $0x28] sm:$0xff pattern:$0x73625140]
    %v543 = vld.sshfl [vmem:[#allocation1 + $0x30] sm:$0xff pattern:$0x73625140]
    %v544 = vld.sshfl [vmem:[#allocation1 + $0x38] sm:$0xff pattern:$0x73625140]
    %v673 = vpack.c.bf16 %v313, %v297
    %v674 = vpack.c.bf16 %v314, %v298
    %v675 = vpack.c.bf16 %v315, %v299
    %v676 = vpack.c.bf16 %v316, %v300
    %v677 = vpack.c.bf16 %v317, %v301
    %v678 = vpack.c.bf16 %v318, %v302
    %v679 = vpack.c.bf16 %v319, %v303
    %v680 = vpack.c.bf16 %v320, %v304
    %v681 = vpack.c.bf16 %v345, %v329
    %v682 = vpack.c.bf16 %v346, %v330
    %v683 = vpack.c.bf16 %v347, %v331
    %v684 = vpack.c.bf16 %v348, %v332
    %v685 = vpack.c.bf16 %v349, %v333
    %v686 = vpack.c.bf16 %v350, %v334
    %v687 = vpack.c.bf16 %v351, %v335
    %v688 = vpack.c.bf16 %v352, %v336
    %v689 = vpack.c.bf16 %v377, %v361
    %v690 = vpack.c.bf16 %v378, %v362
    %v691 = vpack.c.bf16 %v379, %v363
    %v692 = vpack.c.bf16 %v380, %v364
    %v693 = vpack.c.bf16 %v381, %v365
    %v694 = vpack.c.bf16 %v382, %v366
    %v695 = vpack.c.bf16 %v383, %v367
    %v696 = vpack.c.bf16 %v384, %v368
    %v697 = vpack.c.bf16 %v409, %v393
    %v698 = vpack.c.bf16 %v410, %v394
    %v699 = vpack.c.bf16 %v411, %v395
    %v700 = vpack.c.bf16 %v412, %v396
    %v701 = vpack.c.bf16 %v413, %v397
    %v702 = vpack.c.bf16 %v414, %v398
    %v703 = vpack.c.bf16 %v415, %v399
    %v704 = vpack.c.bf16 %v416, %v400
    %v705 = vpack.c.bf16 %v441, %v425
    %v706 = vpack.c.bf16 %v442, %v426
    %v707 = vpack.c.bf16 %v443, %v427
    %v708 = vpack.c.bf16 %v444, %v428
    %v709 = vpack.c.bf16 %v445, %v429
    %v710 = vpack.c.bf16 %v446, %v430
    %v711 = vpack.c.bf16 %v447, %v431
    %v712 = vpack.c.bf16 %v448, %v432
    %v713 = vpack.c.bf16 %v473, %v457
    %v714 = vpack.c.bf16 %v474, %v458
    %v715 = vpack.c.bf16 %v475, %v459
    %v716 = vpack.c.bf16 %v476, %v460
    %v717 = vpack.c.bf16 %v477, %v461
    %v718 = vpack.c.bf16 %v478, %v462
    %v719 = vpack.c.bf16 %v479, %v463
    %v720 = vpack.c.bf16 %v480, %v464
    %v721 = vpack.c.bf16 %v505, %v489
    %v722 = vpack.c.bf16 %v506, %v490
    %v723 = vpack.c.bf16 %v507, %v491
    %v724 = vpack.c.bf16 %v508, %v492
    %v725 = vpack.c.bf16 %v509, %v493
    %v726 = vpack.c.bf16 %v510, %v494
    %v727 = vpack.c.bf16 %v511, %v495
    %v728 = vpack.c.bf16 %v512, %v496
    %v729 = vpack.c.bf16 %v537, %v521
    %v730 = vpack.c.bf16 %v538, %v522
    %v731 = vpack.c.bf16 %v539, %v523
    %v732 = vpack.c.bf16 %v540, %v524
    %v733 = vpack.c.bf16 %v541, %v525
    %v734 = vpack.c.bf16 %v542, %v526
    %v735 = vpack.c.bf16 %v543, %v527
    %v736 = vpack.c.bf16 %v544, %v528
    %v737 = vld [vmem:[%s1] sm:$0xf]
    %v738 = vld [vmem:[%s1 + $0x4] sm:$0xf]
    %v739 = vld [vmem:[%s1 + $0x8] sm:$0xf]
    %v740 = vld [vmem:[%s1 + $0xc] sm:$0xf]
    %v741 = vld [vmem:[%s1 + $0x10] sm:$0xf]
    %v742 = vld [vmem:[%s1 + $0x14] sm:$0xf]
    %v743 = vld [vmem:[%s1 + $0x18] sm:$0xf]
    %v744 = vld [vmem:[%s1 + $0x1c] sm:$0xf]
    %v745 = vld [vmem:[%s1 + $0x20] sm:$0xf]
    %v746 = vld [vmem:[%s1 + $0x24] sm:$0xf]
    %v747 = vld [vmem:[%s1 + $0x28] sm:$0xf]
    %v748 = vld [vmem:[%s1 + $0x2c] sm:$0xf]
    %v749 = vld [vmem:[%s1 + $0x30] sm:$0xf]
    %v750 = vld [vmem:[%s1 + $0x34] sm:$0xf]
    %v751 = vld [vmem:[%s1 + $0x38] sm:$0xf]
    %v752 = vld [vmem:[%s1 + $0x3c] sm:$0xf]
    %v753 = vld [vmem:[%s1 + $0x40] sm:$0xf]
    %v754 = vld [vmem:[%s1 + $0x44] sm:$0xf]
    %v755 = vld [vmem:[%s1 + $0x48] sm:$0xf]
    %v756 = vld [vmem:[%s1 + $0x4c] sm:$0xf]
    %v757 = vld [vmem:[%s1 + $0x50] sm:$0xf]
    %v758 = vld [vmem:[%s1 + $0x54] sm:$0xf]
    %v759 = vld [vmem:[%s1 + $0x58] sm:$0xf]
    %v760 = vld [vmem:[%s1 + $0x5c] sm:$0xf]
    %v761 = vld [vmem:[%s1 + $0x60] sm:$0xf]
    %v762 = vld [vmem:[%s1 + $0x64] sm:$0xf]
    %v763 = vld [vmem:[%s1 + $0x68] sm:$0xf]
    %v764 = vld [vmem:[%s1 + $0x6c] sm:$0xf]
    %v765 = vld [vmem:[%s1 + $0x70] sm:$0xf]
    %v766 = vld [vmem:[%s1 + $0x74] sm:$0xf]
    %v767 = vld [vmem:[%s1 + $0x78] sm:$0xf]
    %v768 = vld [vmem:[%s1 + $0x7c] sm:$0xf]
    %v769 = vld [vmem:[%s1 + $0x80] sm:$0xf]
    %v770 = vld [vmem:[%s1 + $0x84] sm:$0xf]
    %v771 = vld [vmem:[%s1 + $0x88] sm:$0xf]
    %v772 = vld [vmem:[%s1 + $0x8c] sm:$0xf]
    %v773 = vld [vmem:[%s1 + $0x90] sm:$0xf]
    %v774 = vld [vmem:[%s1 + $0x94] sm:$0xf]
    %v775 = vld [vmem:[%s1 + $0x98] sm:$0xf]
    %v776 = vld [vmem:[%s1 + $0x9c] sm:$0xf]
    %v777 = vld [vmem:[%s1 + $0xa0] sm:$0xf]
    %v778 = vld [vmem:[%s1 + $0xa4] sm:$0xf]
    %v779 = vld [vmem:[%s1 + $0xa8] sm:$0xf]
    %v780 = vld [vmem:[%s1 + $0xac] sm:$0xf]
    %v781 = vld [vmem:[%s1 + $0xb0] sm:$0xf]
    %v782 = vld [vmem:[%s1 + $0xb4] sm:$0xf]
    %v783 = vld [vmem:[%s1 + $0xb8] sm:$0xf]
    %v784 = vld [vmem:[%s1 + $0xbc] sm:$0xf]
    %v785 = vld [vmem:[%s1 + $0xc0] sm:$0xf]
    %v786 = vld [vmem:[%s1 + $0xc4] sm:$0xf]
    %v787 = vld [vmem:[%s1 + $0xc8] sm:$0xf]
    %v788 = vld [vmem:[%s1 + $0xcc] sm:$0xf]
    %v789 = vld [vmem:[%s1 + $0xd0] sm:$0xf]
    %v790 = vld [vmem:[%s1 + $0xd4] sm:$0xf]
    %v791 = vld [vmem:[%s1 + $0xd8] sm:$0xf]
    %v792 = vld [vmem:[%s1 + $0xdc] sm:$0xf]
    %v793 = vld [vmem:[%s1 + $0xe0] sm:$0xf]
    %v794 = vld [vmem:[%s1 + $0xe4] sm:$0xf]
    %v795 = vld [vmem:[%s1 + $0xe8] sm:$0xf]
    %v796 = vld [vmem:[%s1 + $0xec] sm:$0xf]
    %v797 = vld [vmem:[%s1 + $0xf0] sm:$0xf]
    %v798 = vld [vmem:[%s1 + $0xf4] sm:$0xf]
    %v799 = vld [vmem:[%s1 + $0xf8] sm:$0xf]
    %v800 = vld [vmem:[%s1 + $0xfc] sm:$0xf]
    %v801 = vld [vmem:[%s1 + $0x100] sm:$0xf]
    %v802 = vld [vmem:[%s1 + $0x104] sm:$0xf]
    %v803 = vld [vmem:[%s1 + $0x108] sm:$0xf]
    %v804 = vld [vmem:[%s1 + $0x10c] sm:$0xf]
    %v805 = vld [vmem:[%s1 + $0x110] sm:$0xf]
    %v806 = vld [vmem:[%s1 + $0x114] sm:$0xf]
    %v807 = vld [vmem:[%s1 + $0x118] sm:$0xf]
    %v808 = vld [vmem:[%s1 + $0x11c] sm:$0xf]
    %v809 = vld [vmem:[%s1 + $0x120] sm:$0xf]
    %v810 = vld [vmem:[%s1 + $0x124] sm:$0xf]
    %v811 = vld [vmem:[%s1 + $0x128] sm:$0xf]
    %v812 = vld [vmem:[%s1 + $0x12c] sm:$0xf]
    %v813 = vld [vmem:[%s1 + $0x130] sm:$0xf]
    %v814 = vld [vmem:[%s1 + $0x134] sm:$0xf]
    %v815 = vld [vmem:[%s1 + $0x138] sm:$0xf]
    %v816 = vld [vmem:[%s1 + $0x13c] sm:$0xf]
    %v817 = vld [vmem:[%s1 + $0x140] sm:$0xf]
    %v818 = vld [vmem:[%s1 + $0x144] sm:$0xf]
    %v819 = vld [vmem:[%s1 + $0x148] sm:$0xf]
    %v820 = vld [vmem:[%s1 + $0x14c] sm:$0xf]
    %v821 = vld [vmem:[%s1 + $0x150] sm:$0xf]
    %v822 = vld [vmem:[%s1 + $0x154] sm:$0xf]
    %v823 = vld [vmem:[%s1 + $0x158] sm:$0xf]
    %v824 = vld [vmem:[%s1 + $0x15c] sm:$0xf]
    %v825 = vld [vmem:[%s1 + $0x160] sm:$0xf]
    %v826 = vld [vmem:[%s1 + $0x164] sm:$0xf]
    %v827 = vld [vmem:[%s1 + $0x168] sm:$0xf]
    %v828 = vld [vmem:[%s1 + $0x16c] sm:$0xf]
    %v829 = vld [vmem:[%s1 + $0x170] sm:$0xf]
    %v830 = vld [vmem:[%s1 + $0x174] sm:$0xf]
    %v831 = vld [vmem:[%s1 + $0x178] sm:$0xf]
    %v832 = vld [vmem:[%s1 + $0x17c] sm:$0xf]
    %v833 = vld [vmem:[%s1 + $0x180] sm:$0xf]
    %v834 = vld [vmem:[%s1 + $0x184] sm:$0xf]
    %v835 = vld [vmem:[%s1 + $0x188] sm:$0xf]
    %v836 = vld [vmem:[%s1 + $0x18c] sm:$0xf]
    %v837 = vld [vmem:[%s1 + $0x190] sm:$0xf]
    %v838 = vld [vmem:[%s1 + $0x194] sm:$0xf]
    %v839 = vld [vmem:[%s1 + $0x198] sm:$0xf]
    %v840 = vld [vmem:[%s1 + $0x19c] sm:$0xf]
    %v841 = vld [vmem:[%s1 + $0x1a0] sm:$0xf]
    %v842 = vld [vmem:[%s1 + $0x1a4] sm:$0xf]
    %v843 = vld [vmem:[%s1 + $0x1a8] sm:$0xf]
    %v844 = vld [vmem:[%s1 + $0x1ac] sm:$0xf]
    %v845 = vld [vmem:[%s1 + $0x1b0] sm:$0xf]
    %v846 = vld [vmem:[%s1 + $0x1b4] sm:$0xf]
    %v847 = vld [vmem:[%s1 + $0x1b8] sm:$0xf]
    %v848 = vld [vmem:[%s1 + $0x1bc] sm:$0xf]
    %v849 = vld [vmem:[%s1 + $0x1c0] sm:$0xf]
    %v850 = vld [vmem:[%s1 + $0x1c4] sm:$0xf]
    %v851 = vld [vmem:[%s1 + $0x1c8] sm:$0xf]
    %v852 = vld [vmem:[%s1 + $0x1cc] sm:$0xf]
    %v853 = vld [vmem:[%s1 + $0x1d0] sm:$0xf]
    %v854 = vld [vmem:[%s1 + $0x1d4] sm:$0xf]
    %v855 = vld [vmem:[%s1 + $0x1d8] sm:$0xf]
    %v856 = vld [vmem:[%s1 + $0x1dc] sm:$0xf]
    %v857 = vld [vmem:[%s1 + $0x1e0] sm:$0xf]
    %v858 = vld [vmem:[%s1 + $0x1e4] sm:$0xf]
    %v859 = vld [vmem:[%s1 + $0x1e8] sm:$0xf]
    %v860 = vld [vmem:[%s1 + $0x1ec] sm:$0xf]
    %v861 = vld [vmem:[%s1 + $0x1f0] sm:$0xf]
    %v862 = vld [vmem:[%s1 + $0x1f4] sm:$0xf]
    %v863 = vld [vmem:[%s1 + $0x1f8] sm:$0xf]
    %v864 = vld [vmem:[%s1 + $0x1fc] sm:$0xf]
    %v865 = vld [vmem:[%s2] sm:$0x1]
    %v867 = vperm.slane %v865, 0
    %v997 = vunpack.c.l.b16 %v737
    %v998 = vunpack.c.l.b16 %v738
    %v999 = vunpack.c.l.b16 %v739
    %v1000 = vunpack.c.l.b16 %v740
    %v1001 = vunpack.c.l.b16 %v741
    %v1002 = vunpack.c.l.b16 %v742
    %v1003 = vunpack.c.l.b16 %v743
    %v1004 = vunpack.c.l.b16 %v744
    %v1005 = vunpack.c.l.b16 %v745
    %v1006 = vunpack.c.l.b16 %v746
    %v1007 = vunpack.c.l.b16 %v747
    %v1008 = vunpack.c.l.b16 %v748
    %v1009 = vunpack.c.l.b16 %v749
    %v1010 = vunpack.c.l.b16 %v750
    %v1011 = vunpack.c.l.b16 %v751
    %v1012 = vunpack.c.l.b16 %v752
    %v1013 = vunpack.c.l.b16 %v753
    %v1014 = vunpack.c.l.b16 %v754
    %v1015 = vunpack.c.l.b16 %v755
    %v1016 = vunpack.c.l.b16 %v756
    %v1017 = vunpack.c.l.b16 %v757
    %v1018 = vunpack.c.l.b16 %v758
    %v1019 = vunpack.c.l.b16 %v759
    %v1020 = vunpack.c.l.b16 %v760
    %v1021 = vunpack.c.l.b16 %v761
    %v1022 = vunpack.c.l.b16 %v762
    %v1023 = vunpack.c.l.b16 %v763
    %v1024 = vunpack.c.l.b16 %v764
    %v1025 = vunpack.c.l.b16 %v765
    %v1026 = vunpack.c.l.b16 %v766
    %v1027 = vunpack.c.l.b16 %v767
    %v1028 = vunpack.c.l.b16 %v768
    %v1029 = vunpack.c.l.b16 %v769
    %v1030 = vunpack.c.l.b16 %v770
    %v1031 = vunpack.c.l.b16 %v771
    %v1032 = vunpack.c.l.b16 %v772
    %v1033 = vunpack.c.l.b16 %v773
    %v1034 = vunpack.c.l.b16 %v774
    %v1035 = vunpack.c.l.b16 %v775
    %v1036 = vunpack.c.l.b16 %v776
    %v1037 = vunpack.c.l.b16 %v777
    %v1038 = vunpack.c.l.b16 %v778
    %v1039 = vunpack.c.l.b16 %v779
    %v1040 = vunpack.c.l.b16 %v780
    %v1041 = vunpack.c.l.b16 %v781
    %v1042 = vunpack.c.l.b16 %v782
    %v1043 = vunpack.c.l.b16 %v783
    %v1044 = vunpack.c.l.b16 %v784
    %v1045 = vunpack.c.l.b16 %v785
    %v1046 = vunpack.c.l.b16 %v786
    %v1047 = vunpack.c.l.b16 %v787
    %v1048 = vunpack.c.l.b16 %v788
    %v1049 = vunpack.c.l.b16 %v789
    %v1050 = vunpack.c.l.b16 %v790
    %v1051 = vunpack.c.l.b16 %v791
    %v1052 = vunpack.c.l.b16 %v792
    %v1053 = vunpack.c.l.b16 %v793
    %v1054 = vunpack.c.l.b16 %v794
    %v1055 = vunpack.c.l.b16 %v795
    %v1056 = vunpack.c.l.b16 %v796
    %v1057 = vunpack.c.l.b16 %v797
    %v1058 = vunpack.c.l.b16 %v798
    %v1059 = vunpack.c.l.b16 %v799
    %v1060 = vunpack.c.l.b16 %v800
    %v1061 = vunpack.c.l.b16 %v801
    %v1062 = vunpack.c.l.b16 %v802
    %v1063 = vunpack.c.l.b16 %v803
    %v1064 = vunpack.c.l.b16 %v804
    %v1065 = vunpack.c.l.b16 %v805
    %v1066 = vunpack.c.l.b16 %v806
    %v1067 = vunpack.c.l.b16 %v807
    %v1068 = vunpack.c.l.b16 %v808
    %v1069 = vunpack.c.l.b16 %v809
    %v1070 = vunpack.c.l.b16 %v810
    %v1071 = vunpack.c.l.b16 %v811
    %v1072 = vunpack.c.l.b16 %v812
    %v1073 = vunpack.c.l.b16 %v813
    %v1074 = vunpack.c.l.b16 %v814
    %v1075 = vunpack.c.l.b16 %v815
    %v1076 = vunpack.c.l.b16 %v816
    %v1077 = vunpack.c.l.b16 %v817
    %v1078 = vunpack.c.l.b16 %v818
    %v1079 = vunpack.c.l.b16 %v819
    %v1080 = vunpack.c.l.b16 %v820
    %v1081 = vunpack.c.l.b16 %v821
    %v1082 = vunpack.c.l.b16 %v822
    %v1083 = vunpack.c.l.b16 %v823
    %v1084 = vunpack.c.l.b16 %v824
    %v1085 = vunpack.c.l.b16 %v825
    %v1086 = vunpack.c.l.b16 %v826
    %v1087 = vunpack.c.l.b16 %v827
    %v1088 = vunpack.c.l.b16 %v828
    %v1089 = vunpack.c.l.b16 %v829
    %v1090 = vunpack.c.l.b16 %v830
    %v1091 = vunpack.c.l.b16 %v831
    %v1092 = vunpack.c.l.b16 %v832
    %v1093 = vunpack.c.l.b16 %v833
    %v1094 = vunpack.c.l.b16 %v834
    %v1095 = vunpack.c.l.b16 %v835
    %v1096 = vunpack.c.l.b16 %v836
    %v1097 = vunpack.c.l.b16 %v837
    %v1098 = vunpack.c.l.b16 %v838
    %v1099 = vunpack.c.l.b16 %v839
    %v1100 = vunpack.c.l.b16 %v840
    %v1101 = vunpack.c.l.b16 %v841
    %v1102 = vunpack.c.l.b16 %v842
    %v1103 = vunpack.c.l.b16 %v843
    %v1104 = vunpack.c.l.b16 %v844
    %v1105 = vunpack.c.l.b16 %v845
    %v1106 = vunpack.c.l.b16 %v846
    %v1107 = vunpack.c.l.b16 %v847
    %v1108 = vunpack.c.l.b16 %v848
    %v1109 = vunpack.c.l.b16 %v849
    %v1110 = vunpack.c.l.b16 %v850
    %v1111 = vunpack.c.l.b16 %v851
    %v1112 = vunpack.c.l.b16 %v852
    %v1113 = vunpack.c.l.b16 %v853
    %v1114 = vunpack.c.l.b16 %v854
    %v1115 = vunpack.c.l.b16 %v855
    %v1116 = vunpack.c.l.b16 %v856
    %v1117 = vunpack.c.l.b16 %v857
    %v1118 = vunpack.c.l.b16 %v858
    %v1119 = vunpack.c.l.b16 %v859
    %v1120 = vunpack.c.l.b16 %v860
    %v1121 = vunpack.c.l.b16 %v861
    %v1122 = vunpack.c.l.b16 %v862
    %v1123 = vunpack.c.l.b16 %v863
    %v1124 = vunpack.c.l.b16 %v864
    %v1125 = vpack.c.b16 %v998, %v997
    %v1126 = vpack.c.b16 %v1000, %v999
    %v1127 = vpack.c.b16 %v1002, %v1001
    %v1128 = vpack.c.b16 %v1004, %v1003
    %v1129 = vpack.c.b16 %v1006, %v1005
    %v1130 = vpack.c.b16 %v1008, %v1007
    %v1131 = vpack.c.b16 %v1010, %v1009
    %v1132 = vpack.c.b16 %v1012, %v1011
    %v1133 = vpack.c.b16 %v1014, %v1013
    %v1134 = vpack.c.b16 %v1016, %v1015
    %v1135 = vpack.c.b16 %v1018, %v1017
    %v1136 = vpack.c.b16 %v1020, %v1019
    %v1137 = vpack.c.b16 %v1022, %v1021
    %v1138 = vpack.c.b16 %v1024, %v1023
    %v1139 = vpack.c.b16 %v1026, %v1025
    %v1140 = vpack.c.b16 %v1028, %v1027
    %v1141 = vpack.c.b16 %v1030, %v1029
    %v1142 = vpack.c.b16 %v1032, %v1031
    %v1143 = vpack.c.b16 %v1034, %v1033
    %v1144 = vpack.c.b16 %v1036, %v1035
    %v1145 = vpack.c.b16 %v1038, %v1037
    %v1146 = vpack.c.b16 %v1040, %v1039
    %v1147 = vpack.c.b16 %v1042, %v1041
    %v1148 = vpack.c.b16 %v1044, %v1043
    %v1149 = vpack.c.b16 %v1046, %v1045
    %v1150 = vpack.c.b16 %v1048, %v1047
    %v1151 = vpack.c.b16 %v1050, %v1049
    %v1152 = vpack.c.b16 %v1052, %v1051
    %v1153 = vpack.c.b16 %v1054, %v1053
    %v1154 = vpack.c.b16 %v1056, %v1055
    %v1155 = vpack.c.b16 %v1058, %v1057
    %v1156 = vpack.c.b16 %v1060, %v1059
    %v1157 = vpack.c.b16 %v1062, %v1061
    %v1158 = vpack.c.b16 %v1064, %v1063
    %v1159 = vpack.c.b16 %v1066, %v1065
    %v1160 = vpack.c.b16 %v1068, %v1067
    %v1161 = vpack.c.b16 %v1070, %v1069
    %v1162 = vpack.c.b16 %v1072, %v1071
    %v1163 = vpack.c.b16 %v1074, %v1073
    %v1164 = vpack.c.b16 %v1076, %v1075
    %v1165 = vpack.c.b16 %v1078, %v1077
    %v1166 = vpack.c.b16 %v1080, %v1079
    %v1167 = vpack.c.b16 %v1082, %v1081
    %v1168 = vpack.c.b16 %v1084, %v1083
    %v1169 = vpack.c.b16 %v1086, %v1085
    %v1170 = vpack.c.b16 %v1088, %v1087
    %v1171 = vpack.c.b16 %v1090, %v1089
    %v1172 = vpack.c.b16 %v1092, %v1091
    %v1173 = vpack.c.b16 %v1094, %v1093
    %v1174 = vpack.c.b16 %v1096, %v1095
    %v1175 = vpack.c.b16 %v1098, %v1097
    %v1176 = vpack.c.b16 %v1100, %v1099
    %v1177 = vpack.c.b16 %v1102, %v1101
    %v1178 = vpack.c.b16 %v1104, %v1103
    %v1179 = vpack.c.b16 %v1106, %v1105
    %v1180 = vpack.c.b16 %v1108, %v1107
    %v1181 = vpack.c.b16 %v1110, %v1109
    %v1182 = vpack.c.b16 %v1112, %v1111
    %v1183 = vpack.c.b16 %v1114, %v1113
    %v1184 = vpack.c.b16 %v1116, %v1115
    %v1185 = vpack.c.b16 %v1118, %v1117
    %v1186 = vpack.c.b16 %v1120, %v1119
    %v1187 = vpack.c.b16 %v1122, %v1121
    %v1188 = vpack.c.b16 %v1124, %v1123
    %1253 = vmatpush.bf16.msra.mxu0 %v1132
    %1254 = vmatpush.bf16.msra.mxu0 %v1131
    %1255 = vmatpush.bf16.msra.mxu0 %v1130
    %1256 = vmatpush.bf16.msra.mxu0 %v1129
    %1257 = vmatpush.bf16.msra.mxu0 %v1128
    %1258 = vmatpush.bf16.msra.mxu0 %v1127
    %1259 = vmatpush.bf16.msra.mxu0 %v1126
    %1260 = vmatpush.bf16.msra.mxu0 %v1125
    %1261 = vmatmul.bf16.gmra.mxu0 %v673
    %v1262 = vpop.f32.mrf.mxu0
    %v1263 = vadd.f32 %v867, %v1262
    %v1264 = vpop.f32.mrf.mxu0
    %v1265 = vadd.f32 %v867, %v1264
    %1266 = vmatmul.bf16.gmra.mxu0 %v681
    %v1267 = vpop.f32.mrf.mxu0
    %v1268 = vadd.f32 %v867, %v1267
    %v1269 = vpop.f32.mrf.mxu0
    %v1270 = vadd.f32 %v867, %v1269
    %1271 = vmatmul.bf16.gmra.mxu0 %v689
    %v1272 = vpop.f32.mrf.mxu0
    %v1273 = vadd.f32 %v867, %v1272
    %v1274 = vpop.f32.mrf.mxu0
    %v1275 = vadd.f32 %v867, %v1274
    %1276 = vmatmul.bf16.gmra.mxu0 %v697
    %v1277 = vpop.f32.mrf.mxu0
    %v1278 = vadd.f32 %v867, %v1277
    %v1279 = vpop.f32.mrf.mxu0
    %v1280 = vadd.f32 %v867, %v1279
    %1281 = vmatmul.bf16.gmra.mxu0 %v705
    %v1282 = vpop.f32.mrf.mxu0
    %v1283 = vadd.f32 %v867, %v1282
    %v1284 = vpop.f32.mrf.mxu0
    %v1285 = vadd.f32 %v867, %v1284
    %1286 = vmatmul.bf16.gmra.mxu0 %v713
    %v1287 = vpop.f32.mrf.mxu0
    %v1288 = vadd.f32 %v867, %v1287
    %v1289 = vpop.f32.mrf.mxu0
    %v1290 = vadd.f32 %v867, %v1289
    %1291 = vmatmul.bf16.gmra.mxu0 %v721
    %v1292 = vpop.f32.mrf.mxu0
    %v1293 = vadd.f32 %v867, %v1292
    %v1294 = vpop.f32.mrf.mxu0
    %v1295 = vadd.f32 %v867, %v1294
    %1296 = vmatmul.bf16.gmra.mxu0 %v729
    %v1297 = vpop.f32.mrf.mxu0
    %v1298 = vadd.f32 %v867, %v1297
    %v1299 = vpop.f32.mrf.mxu0
    %v1300 = vadd.f32 %v867, %v1299
    %1301 = vdwg.mxu0
    %1302 = vmatpush.bf16.msra.mxu0 %v1140
    %1303 = vmatpush.bf16.msra.mxu0 %v1139
    %1304 = vmatpush.bf16.msra.mxu0 %v1138
    %1305 = vmatpush.bf16.msra.mxu0 %v1137
    %1306 = vmatpush.bf16.msra.mxu0 %v1136
    %1307 = vmatpush.bf16.msra.mxu0 %v1135
    %1308 = vmatpush.bf16.msra.mxu0 %v1134
    %1309 = vmatpush.bf16.msra.mxu0 %v1133
    %1310 = vmatmul.bf16.gmra.mxu0 %v674
    %v1311 = vpop.f32.mrf.mxu0
    %v1312 = vadd.f32 %v1263, %v1311
    %v1313 = vpop.f32.mrf.mxu0
    %v1314 = vadd.f32 %v1265, %v1313
    %1315 = vmatmul.bf16.gmra.mxu0 %v682
    %v1316 = vpop.f32.mrf.mxu0
    %v1317 = vadd.f32 %v1268, %v1316
    %v1318 = vpop.f32.mrf.mxu0
    %v1319 = vadd.f32 %v1270, %v1318
    %1320 = vmatmul.bf16.gmra.mxu0 %v690
    %v1321 = vpop.f32.mrf.mxu0
    %v1322 = vadd.f32 %v1273, %v1321
    %v1323 = vpop.f32.mrf.mxu0
    %v1324 = vadd.f32 %v1275, %v1323
    %1325 = vmatmul.bf16.gmra.mxu0 %v698
    %v1326 = vpop.f32.mrf.mxu0
    %v1327 = vadd.f32 %v1278, %v1326
    %v1328 = vpop.f32.mrf.mxu0
    %v1329 = vadd.f32 %v1280, %v1328
    %1330 = vmatmul.bf16.gmra.mxu0 %v706
    %v1331 = vpop.f32.mrf.mxu0
    %v1332 = vadd.f32 %v1283, %v1331
    %v1333 = vpop.f32.mrf.mxu0
    %v1334 = vadd.f32 %v1285, %v1333
    %1335 = vmatmul.bf16.gmra.mxu0 %v714
    %v1336 = vpop.f32.mrf.mxu0
    %v1337 = vadd.f32 %v1288, %v1336
    %v1338 = vpop.f32.mrf.mxu0
    %v1339 = vadd.f32 %v1290, %v1338
    %1340 = vmatmul.bf16.gmra.mxu0 %v722
    %v1341 = vpop.f32.mrf.mxu0
    %v1342 = vadd.f32 %v1293, %v1341
    %v1343 = vpop.f32.mrf.mxu0
    %v1344 = vadd.f32 %v1295, %v1343
    %1345 = vmatmul.bf16.gmra.mxu0 %v730
    %v1346 = vpop.f32.mrf.mxu0
    %v1347 = vadd.f32 %v1298, %v1346
    %v1348 = vpop.f32.mrf.mxu0
    %v1349 = vadd.f32 %v1300, %v1348
    %1350 = vdwg.mxu0
    %1351 = vmatpush.bf16.msra.mxu0 %v1148
    %1352 = vmatpush.bf16.msra.mxu0 %v1147
    %1353 = vmatpush.bf16.msra.mxu0 %v1146
    %1354 = vmatpush.bf16.msra.mxu0 %v1145
    %1355 = vmatpush.bf16.msra.mxu0 %v1144
    %1356 = vmatpush.bf16.msra.mxu0 %v1143
    %1357 = vmatpush.bf16.msra.mxu0 %v1142
    %1358 = vmatpush.bf16.msra.mxu0 %v1141
    %1359 = vmatmul.bf16.gmra.mxu0 %v675
    %v1360 = vpop.f32.mrf.mxu0
    %v1361 = vadd.f32 %v1312, %v1360
    %v1362 = vpop.f32.mrf.mxu0
    %v1363 = vadd.f32 %v1314, %v1362
    %1364 = vmatmul.bf16.gmra.mxu0 %v683
    %v1365 = vpop.f32.mrf.mxu0
    %v1366 = vadd.f32 %v1317, %v1365
    %v1367 = vpop.f32.mrf.mxu0
    %v1368 = vadd.f32 %v1319, %v1367
    %1369 = vmatmul.bf16.gmra.mxu0 %v691
    %v1370 = vpop.f32.mrf.mxu0
    %v1371 = vadd.f32 %v1322, %v1370
    %v1372 = vpop.f32.mrf.mxu0
    %v1373 = vadd.f32 %v1324, %v1372
    %1374 = vmatmul.bf16.gmra.mxu0 %v699
    %v1375 = vpop.f32.mrf.mxu0
    %v1376 = vadd.f32 %v1327, %v1375
    %v1377 = vpop.f32.mrf.mxu0
    %v1378 = vadd.f32 %v1329, %v1377
    %1379 = vmatmul.bf16.gmra.mxu0 %v707
    %v1380 = vpop.f32.mrf.mxu0
    %v1381 = vadd.f32 %v1332, %v1380
    %v1382 = vpop.f32.mrf.mxu0
    %v1383 = vadd.f32 %v1334, %v1382
    %1384 = vmatmul.bf16.gmra.mxu0 %v715
    %v1385 = vpop.f32.mrf.mxu0
    %v1386 = vadd.f32 %v1337, %v1385
    %v1387 = vpop.f32.mrf.mxu0
    %v1388 = vadd.f32 %v1339, %v1387
    %1389 = vmatmul.bf16.gmra.mxu0 %v723
    %v1390 = vpop.f32.mrf.mxu0
    %v1391 = vadd.f32 %v1342, %v1390
    %v1392 = vpop.f32.mrf.mxu0
    %v1393 = vadd.f32 %v1344, %v1392
    %1394 = vmatmul.bf16.gmra.mxu0 %v731
    %v1395 = vpop.f32.mrf.mxu0
    %v1396 = vadd.f32 %v1347, %v1395
    %v1397 = vpop.f32.mrf.mxu0
    %v1398 = vadd.f32 %v1349, %v1397
    %1399 = vdwg.mxu0
    %1400 = vmatpush.bf16.msra.mxu0 %v1156
    %1401 = vmatpush.bf16.msra.mxu0 %v1155
    %1402 = vmatpush.bf16.msra.mxu0 %v1154
    %1403 = vmatpush.bf16.msra.mxu0 %v1153
    %1404 = vmatpush.bf16.msra.mxu0 %v1152
    %1405 = vmatpush.bf16.msra.mxu0 %v1151
    %1406 = vmatpush.bf16.msra.mxu0 %v1150
    %1407 = vmatpush.bf16.msra.mxu0 %v1149
    %1408 = vmatmul.bf16.gmra.mxu0 %v676
    %v1409 = vpop.f32.mrf.mxu0
    %v1410 = vadd.f32 %v1361, %v1409
    %v1411 = vpop.f32.mrf.mxu0
    %v1412 = vadd.f32 %v1363, %v1411
    %1413 = vmatmul.bf16.gmra.mxu0 %v684
    %v1414 = vpop.f32.mrf.mxu0
    %v1415 = vadd.f32 %v1366, %v1414
    %v1416 = vpop.f32.mrf.mxu0
    %v1417 = vadd.f32 %v1368, %v1416
    %1418 = vmatmul.bf16.gmra.mxu0 %v692
    %v1419 = vpop.f32.mrf.mxu0
    %v1420 = vadd.f32 %v1371, %v1419
    %v1421 = vpop.f32.mrf.mxu0
    %v1422 = vadd.f32 %v1373, %v1421
    %1423 = vmatmul.bf16.gmra.mxu0 %v700
    %v1424 = vpop.f32.mrf.mxu0
    %v1425 = vadd.f32 %v1376, %v1424
    %v1426 = vpop.f32.mrf.mxu0
    %v1427 = vadd.f32 %v1378, %v1426
    %1428 = vmatmul.bf16.gmra.mxu0 %v708
    %v1429 = vpop.f32.mrf.mxu0
    %v1430 = vadd.f32 %v1381, %v1429
    %v1431 = vpop.f32.mrf.mxu0
    %v1432 = vadd.f32 %v1383, %v1431
    %1433 = vmatmul.bf16.gmra.mxu0 %v716
    %v1434 = vpop.f32.mrf.mxu0
    %v1435 = vadd.f32 %v1386, %v1434
    %v1436 = vpop.f32.mrf.mxu0
    %v1437 = vadd.f32 %v1388, %v1436
    %1438 = vmatmul.bf16.gmra.mxu0 %v724
    %v1439 = vpop.f32.mrf.mxu0
    %v1440 = vadd.f32 %v1391, %v1439
    %v1441 = vpop.f32.mrf.mxu0
    %v1442 = vadd.f32 %v1393, %v1441
    %1443 = vmatmul.bf16.gmra.mxu0 %v732
    %v1444 = vpop.f32.mrf.mxu0
    %v1445 = vadd.f32 %v1396, %v1444
    %v1446 = vpop.f32.mrf.mxu0
    %v1447 = vadd.f32 %v1398, %v1446
    %1448 = vdwg.mxu0
    %1449 = vmatpush.bf16.msra.mxu0 %v1164
    %1450 = vmatpush.bf16.msra.mxu0 %v1163
    %1451 = vmatpush.bf16.msra.mxu0 %v1162
    %1452 = vmatpush.bf16.msra.mxu0 %v1161
    %1453 = vmatpush.bf16.msra.mxu0 %v1160
    %1454 = vmatpush.bf16.msra.mxu0 %v1159
    %1455 = vmatpush.bf16.msra.mxu0 %v1158
    %1456 = vmatpush.bf16.msra.mxu0 %v1157
    %1457 = vmatmul.bf16.gmra.mxu0 %v677
    %v1458 = vpop.f32.mrf.mxu0
    %v1459 = vadd.f32 %v1410, %v1458
    %v1460 = vpop.f32.mrf.mxu0
    %v1461 = vadd.f32 %v1412, %v1460
    %1462 = vmatmul.bf16.gmra.mxu0 %v685
    %v1463 = vpop.f32.mrf.mxu0
    %v1464 = vadd.f32 %v1415, %v1463
    %v1465 = vpop.f32.mrf.mxu0
    %v1466 = vadd.f32 %v1417, %v1465
    %1467 = vmatmul.bf16.gmra.mxu0 %v693
    %v1468 = vpop.f32.mrf.mxu0
    %v1469 = vadd.f32 %v1420, %v1468
    %v1470 = vpop.f32.mrf.mxu0
    %v1471 = vadd.f32 %v1422, %v1470
    %1472 = vmatmul.bf16.gmra.mxu0 %v701
    %v1473 = vpop.f32.mrf.mxu0
    %v1474 = vadd.f32 %v1425, %v1473
    %v1475 = vpop.f32.mrf.mxu0
    %v1476 = vadd.f32 %v1427, %v1475
    %1477 = vmatmul.bf16.gmra.mxu0 %v709
    %v1478 = vpop.f32.mrf.mxu0
    %v1479 = vadd.f32 %v1430, %v1478
    %v1480 = vpop.f32.mrf.mxu0
    %v1481 = vadd.f32 %v1432, %v1480
    %1482 = vmatmul.bf16.gmra.mxu0 %v717
    %v1483 = vpop.f32.mrf.mxu0
    %v1484 = vadd.f32 %v1435, %v1483
    %v1485 = vpop.f32.mrf.mxu0
    %v1486 = vadd.f32 %v1437, %v1485
    %1487 = vmatmul.bf16.gmra.mxu0 %v725
    %v1488 = vpop.f32.mrf.mxu0
    %v1489 = vadd.f32 %v1440, %v1488
    %v1490 = vpop.f32.mrf.mxu0
    %v1491 = vadd.f32 %v1442, %v1490
    %1492 = vmatmul.bf16.gmra.mxu0 %v733
    %v1493 = vpop.f32.mrf.mxu0
    %v1494 = vadd.f32 %v1445, %v1493
    %v1495 = vpop.f32.mrf.mxu0
    %v1496 = vadd.f32 %v1447, %v1495
    %1497 = vdwg.mxu0
    %1498 = vmatpush.bf16.msra.mxu0 %v1172
    %1499 = vmatpush.bf16.msra.mxu0 %v1171
    %1500 = vmatpush.bf16.msra.mxu0 %v1170
    %1501 = vmatpush.bf16.msra.mxu0 %v1169
    %1502 = vmatpush.bf16.msra.mxu0 %v1168
    %1503 = vmatpush.bf16.msra.mxu0 %v1167
    %1504 = vmatpush.bf16.msra.mxu0 %v1166
    %1505 = vmatpush.bf16.msra.mxu0 %v1165
    %1506 = vmatmul.bf16.gmra.mxu0 %v678
    %v1507 = vpop.f32.mrf.mxu0
    %v1508 = vadd.f32 %v1459, %v1507
    %v1509 = vpop.f32.mrf.mxu0
    %v1510 = vadd.f32 %v1461, %v1509
    %1511 = vmatmul.bf16.gmra.mxu0 %v686
    %v1512 = vpop.f32.mrf.mxu0
    %v1513 = vadd.f32 %v1464, %v1512
    %v1514 = vpop.f32.mrf.mxu0
    %v1515 = vadd.f32 %v1466, %v1514
    %1516 = vmatmul.bf16.gmra.mxu0 %v694
    %v1517 = vpop.f32.mrf.mxu0
    %v1518 = vadd.f32 %v1469, %v1517
    %v1519 = vpop.f32.mrf.mxu0
    %v1520 = vadd.f32 %v1471, %v1519
    %1521 = vmatmul.bf16.gmra.mxu0 %v702
    %v1522 = vpop.f32.mrf.mxu0
    %v1523 = vadd.f32 %v1474, %v1522
    %v1524 = vpop.f32.mrf.mxu0
    %v1525 = vadd.f32 %v1476, %v1524
    %1526 = vmatmul.bf16.gmra.mxu0 %v710
    %v1527 = vpop.f32.mrf.mxu0
    %v1528 = vadd.f32 %v1479, %v1527
    %v1529 = vpop.f32.mrf.mxu0
    %v1530 = vadd.f32 %v1481, %v1529
    %1531 = vmatmul.bf16.gmra.mxu0 %v718
    %v1532 = vpop.f32.mrf.mxu0
    %v1533 = vadd.f32 %v1484, %v1532
    %v1534 = vpop.f32.mrf.mxu0
    %v1535 = vadd.f32 %v1486, %v1534
    %1536 = vmatmul.bf16.gmra.mxu0 %v726
    %v1537 = vpop.f32.mrf.mxu0
    %v1538 = vadd.f32 %v1489, %v1537
    %v1539 = vpop.f32.mrf.mxu0
    %v1540 = vadd.f32 %v1491, %v1539
    %1541 = vmatmul.bf16.gmra.mxu0 %v734
    %v1542 = vpop.f32.mrf.mxu0
    %v1543 = vadd.f32 %v1494, %v1542
    %v1544 = vpop.f32.mrf.mxu0
    %v1545 = vadd.f32 %v1496, %v1544
    %1546 = vdwg.mxu0
    %1547 = vmatpush.bf16.msra.mxu0 %v1180
    %1548 = vmatpush.bf16.msra.mxu0 %v1179
    %1549 = vmatpush.bf16.msra.mxu0 %v1178
    %1550 = vmatpush.bf16.msra.mxu0 %v1177
    %1551 = vmatpush.bf16.msra.mxu0 %v1176
    %1552 = vmatpush.bf16.msra.mxu0 %v1175
    %1553 = vmatpush.bf16.msra.mxu0 %v1174
    %1554 = vmatpush.bf16.msra.mxu0 %v1173
    %1555 = vmatmul.bf16.gmra.mxu0 %v679
    %v1556 = vpop.f32.mrf.mxu0
    %v1557 = vadd.f32 %v1508, %v1556
    %v1558 = vpop.f32.mrf.mxu0
    %v1559 = vadd.f32 %v1510, %v1558
    %1560 = vmatmul.bf16.gmra.mxu0 %v687
    %v1561 = vpop.f32.mrf.mxu0
    %v1562 = vadd.f32 %v1513, %v1561
    %v1563 = vpop.f32.mrf.mxu0
    %v1564 = vadd.f32 %v1515, %v1563
    %1565 = vmatmul.bf16.gmra.mxu0 %v695
    %v1566 = vpop.f32.mrf.mxu0
    %v1567 = vadd.f32 %v1518, %v1566
    %v1568 = vpop.f32.mrf.mxu0
    %v1569 = vadd.f32 %v1520, %v1568
    %1570 = vmatmul.bf16.gmra.mxu0 %v703
    %v1571 = vpop.f32.mrf.mxu0
    %v1572 = vadd.f32 %v1523, %v1571
    %v1573 = vpop.f32.mrf.mxu0
    %v1574 = vadd.f32 %v1525, %v1573
    %1575 = vmatmul.bf16.gmra.mxu0 %v711
    %v1576 = vpop.f32.mrf.mxu0
    %v1577 = vadd.f32 %v1528, %v1576
    %v1578 = vpop.f32.mrf.mxu0
    %v1579 = vadd.f32 %v1530, %v1578
    %1580 = vmatmul.bf16.gmra.mxu0 %v719
    %v1581 = vpop.f32.mrf.mxu0
    %v1582 = vadd.f32 %v1533, %v1581
    %v1583 = vpop.f32.mrf.mxu0
    %v1584 = vadd.f32 %v1535, %v1583
    %1585 = vmatmul.bf16.gmra.mxu0 %v727
    %v1586 = vpop.f32.mrf.mxu0
    %v1587 = vadd.f32 %v1538, %v1586
    %v1588 = vpop.f32.mrf.mxu0
    %v1589 = vadd.f32 %v1540, %v1588
    %1590 = vmatmul.bf16.gmra.mxu0 %v735
    %v1591 = vpop.f32.mrf.mxu0
    %v1592 = vadd.f32 %v1543, %v1591
    %v1593 = vpop.f32.mrf.mxu0
    %v1594 = vadd.f32 %v1545, %v1593
    %1595 = vdwg.mxu0
    %1596 = vmatpush.bf16.msra.mxu0 %v1188
    %1597 = vmatpush.bf16.msra.mxu0 %v1187
    %1598 = vmatpush.bf16.msra.mxu0 %v1186
    %1599 = vmatpush.bf16.msra.mxu0 %v1185
    %1600 = vmatpush.bf16.msra.mxu0 %v1184
    %1601 = vmatpush.bf16.msra.mxu0 %v1183
    %1602 = vmatpush.bf16.msra.mxu0 %v1182
    %1603 = vmatpush.bf16.msra.mxu0 %v1181
    %1604 = vmatmul.bf16.gmra.mxu0 %v680
    %v1605 = vpop.f32.mrf.mxu0
    %v1606 = vadd.f32 %v1557, %v1605
    %v1607 = vpop.f32.mrf.mxu0
    %v1608 = vadd.f32 %v1559, %v1607
    %1609 = vmatmul.bf16.gmra.mxu0 %v688
    %v1610 = vpop.f32.mrf.mxu0
    %v1611 = vadd.f32 %v1562, %v1610
    %v1612 = vpop.f32.mrf.mxu0
    %v1613 = vadd.f32 %v1564, %v1612
    %1614 = vmatmul.bf16.gmra.mxu0 %v696
    %v1615 = vpop.f32.mrf.mxu0
    %v1616 = vadd.f32 %v1567, %v1615
    %v1617 = vpop.f32.mrf.mxu0
    %v1618 = vadd.f32 %v1569, %v1617
    %1619 = vmatmul.bf16.gmra.mxu0 %v704
    %v1620 = vpop.f32.mrf.mxu0
    %v1621 = vadd.f32 %v1572, %v1620
    %v1622 = vpop.f32.mrf.mxu0
    %v1623 = vadd.f32 %v1574, %v1622
    %1624 = vmatmul.bf16.gmra.mxu0 %v712
    %v1625 = vpop.f32.mrf.mxu0
    %v1626 = vadd.f32 %v1577, %v1625
    %v1627 = vpop.f32.mrf.mxu0
    %v1628 = vadd.f32 %v1579, %v1627
    %1629 = vmatmul.bf16.gmra.mxu0 %v720
    %v1630 = vpop.f32.mrf.mxu0
    %v1631 = vadd.f32 %v1582, %v1630
    %v1632 = vpop.f32.mrf.mxu0
    %v1633 = vadd.f32 %v1584, %v1632
    %1634 = vmatmul.bf16.gmra.mxu0 %v728
    %v1635 = vpop.f32.mrf.mxu0
    %v1636 = vadd.f32 %v1587, %v1635
    %v1637 = vpop.f32.mrf.mxu0
    %v1638 = vadd.f32 %v1589, %v1637
    %1639 = vmatmul.bf16.gmra.mxu0 %v736
    %v1640 = vpop.f32.mrf.mxu0
    %v1641 = vadd.f32 %v1592, %v1640
    %v1642 = vpop.f32.mrf.mxu0
    %v1643 = vadd.f32 %v1594, %v1642
    %1644 = vdwg.mxu0
    %v1645 = vmax.f32 %v1606, 0.0
    %v1646 = vmax.f32 %v1608, 0.0
    %v1647 = vmax.f32 %v1611, 0.0
    %v1648 = vmax.f32 %v1613, 0.0
    %v1649 = vmax.f32 %v1616, 0.0
    %v1650 = vmax.f32 %v1618, 0.0
    %v1651 = vmax.f32 %v1621, 0.0
    %v1652 = vmax.f32 %v1623, 0.0
    %v1653 = vmax.f32 %v1626, 0.0
    %v1654 = vmax.f32 %v1628, 0.0
    %v1655 = vmax.f32 %v1631, 0.0
    %v1656 = vmax.f32 %v1633, 0.0
    %v1657 = vmax.f32 %v1636, 0.0
    %v1658 = vmax.f32 %v1638, 0.0
    %v1659 = vmax.f32 %v1641, 0.0
    %v1660 = vmax.f32 %v1643, 0.0
    %v1661 = vpack.c.bf16 %v1646, %v1645
    %v1662 = vpack.c.bf16 %v1648, %v1647
    %v1663 = vpack.c.bf16 %v1650, %v1649
    %v1664 = vpack.c.bf16 %v1652, %v1651
    %v1665 = vpack.c.bf16 %v1654, %v1653
    %v1666 = vpack.c.bf16 %v1656, %v1655
    %v1667 = vpack.c.bf16 %v1658, %v1657
    %v1668 = vpack.c.bf16 %v1660, %v1659
    %v1669 = vld [vmem:[%s3] sm:$0xf]
    %v1670 = vld [vmem:[%s3 + $0x4] sm:$0xf]
    %v1671 = vld [vmem:[%s3 + $0x8] sm:$0xf]
    %v1672 = vld [vmem:[%s3 + $0xc] sm:$0xf]
    %v1673 = vld [vmem:[%s3 + $0x10] sm:$0xf]
    %v1674 = vld [vmem:[%s3 + $0x14] sm:$0xf]
    %v1675 = vld [vmem:[%s3 + $0x18] sm:$0xf]
    %v1676 = vld [vmem:[%s3 + $0x1c] sm:$0xf]
    %v1677 = vld [vmem:[%s3 + $0x20] sm:$0xf]
    %v1678 = vld [vmem:[%s3 + $0x24] sm:$0xf]
    %v1679 = vld [vmem:[%s3 + $0x28] sm:$0xf]
    %v1680 = vld [vmem:[%s3 + $0x2c] sm:$0xf]
    %v1681 = vld [vmem:[%s3 + $0x30] sm:$0xf]
    %v1682 = vld [vmem:[%s3 + $0x34] sm:$0xf]
    %v1683 = vld [vmem:[%s3 + $0x38] sm:$0xf]
    %v1684 = vld [vmem:[%s3 + $0x3c] sm:$0xf]
    %v1685 = vld [vmem:[%s4] sm:$0x1]
    %v1687 = vperm.slane %v1685, 0
    %v1705 = vunpack.c.l.b16 %v1669
    %v1706 = vunpack.c.l.b16 %v1670
    %v1707 = vunpack.c.l.b16 %v1671
    %v1708 = vunpack.c.l.b16 %v1672
    %v1709 = vunpack.c.l.b16 %v1673
    %v1710 = vunpack.c.l.b16 %v1674
    %v1711 = vunpack.c.l.b16 %v1675
    %v1712 = vunpack.c.l.b16 %v1676
    %v1713 = vunpack.c.l.b16 %v1677
    %v1714 = vunpack.c.l.b16 %v1678
    %v1715 = vunpack.c.l.b16 %v1679
    %v1716 = vunpack.c.l.b16 %v1680
    %v1717 = vunpack.c.l.b16 %v1681
    %v1718 = vunpack.c.l.b16 %v1682
    %v1719 = vunpack.c.l.b16 %v1683
    %v1720 = vunpack.c.l.b16 %v1684
    %v1721 = vpack.c.b16 %v1706, %v1705
    %v1722 = vpack.c.b16 %v1708, %v1707
    %v1723 = vpack.c.b16 %v1710, %v1709
    %v1724 = vpack.c.b16 %v1712, %v1711
    %v1725 = vpack.c.b16 %v1714, %v1713
    %v1726 = vpack.c.b16 %v1716, %v1715
    %v1727 = vpack.c.b16 %v1718, %v1717
    %v1728 = vpack.c.b16 %v1720, %v1719
    %1737 = vmatpush.bf16.msra.mxu0 %v1728
    %1738 = vmatpush.bf16.msra.mxu0 %v1727
    %1739 = vmatpush.bf16.msra.mxu0 %v1726
    %1740 = vmatpush.bf16.msra.mxu0 %v1725
    %1741 = vmatpush.bf16.msra.mxu0 %v1724
    %1742 = vmatpush.bf16.msra.mxu0 %v1723
    %1743 = vmatpush.bf16.msra.mxu0 %v1722
    %1744 = vmatpush.bf16.msra.mxu0 %v1721
    %1745 = vmatmul.bf16.gmra.mxu0 %v1661
    %v1746 = vpop.f32.mrf.mxu0
    %v1747 = vadd.f32 %v1687, %v1746
    %v1748 = vpop.f32.mrf.mxu0
    %v1749 = vadd.f32 %v1687, %v1748
    %1750 = vmatmul.bf16.gmra.mxu0 %v1662
    %v1751 = vpop.f32.mrf.mxu0
    %v1752 = vadd.f32 %v1687, %v1751
    %v1753 = vpop.f32.mrf.mxu0
    %v1754 = vadd.f32 %v1687, %v1753
    %1755 = vmatmul.bf16.gmra.mxu0 %v1663
    %v1756 = vpop.f32.mrf.mxu0
    %v1757 = vadd.f32 %v1687, %v1756
    %v1758 = vpop.f32.mrf.mxu0
    %v1759 = vadd.f32 %v1687, %v1758
    %1760 = vmatmul.bf16.gmra.mxu0 %v1664
    %v1761 = vpop.f32.mrf.mxu0
    %v1762 = vadd.f32 %v1687, %v1761
    %v1763 = vpop.f32.mrf.mxu0
    %v1764 = vadd.f32 %v1687, %v1763
    %1765 = vmatmul.bf16.gmra.mxu0 %v1665
    %v1766 = vpop.f32.mrf.mxu0
    %v1767 = vadd.f32 %v1687, %v1766
    %v1768 = vpop.f32.mrf.mxu0
    %v1769 = vadd.f32 %v1687, %v1768
    %1770 = vmatmul.bf16.gmra.mxu0 %v1666
    %v1771 = vpop.f32.mrf.mxu0
    %v1772 = vadd.f32 %v1687, %v1771
    %v1773 = vpop.f32.mrf.mxu0
    %v1774 = vadd.f32 %v1687, %v1773
    %1775 = vmatmul.bf16.gmra.mxu0 %v1667
    %v1776 = vpop.f32.mrf.mxu0
    %v1777 = vadd.f32 %v1687, %v1776
    %v1778 = vpop.f32.mrf.mxu0
    %v1779 = vadd.f32 %v1687, %v1778
    %1780 = vmatmul.bf16.gmra.mxu0 %v1668
    %v1781 = vpop.f32.mrf.mxu0
    %v1782 = vadd.f32 %v1687, %v1781
    %v1783 = vpop.f32.mrf.mxu0
    %v1784 = vadd.f32 %v1687, %v1783
    %1785 = vdwg.mxu0
    %v1786 = vmax.f32 %v1747, 0.0
    %v1787 = vmax.f32 %v1749, 0.0
    %v1788 = vmax.f32 %v1752, 0.0
    %v1789 = vmax.f32 %v1754, 0.0
    %v1790 = vmax.f32 %v1757, 0.0
    %v1791 = vmax.f32 %v1759, 0.0
    %v1792 = vmax.f32 %v1762, 0.0
    %v1793 = vmax.f32 %v1764, 0.0
    %v1794 = vmax.f32 %v1767, 0.0
    %v1795 = vmax.f32 %v1769, 0.0
    %v1796 = vmax.f32 %v1772, 0.0
    %v1797 = vmax.f32 %v1774, 0.0
    %v1798 = vmax.f32 %v1777, 0.0
    %v1799 = vmax.f32 %v1779, 0.0
    %v1800 = vmax.f32 %v1782, 0.0
    %v1801 = vmax.f32 %v1784, 0.0
    %v1802 = vpack.c.bf16 %v1787, %v1786
    %v1803 = vpack.c.bf16 %v1789, %v1788
    %v1804 = vpack.c.bf16 %v1791, %v1790
    %v1805 = vpack.c.bf16 %v1793, %v1792
    %v1806 = vpack.c.bf16 %v1795, %v1794
    %v1807 = vpack.c.bf16 %v1797, %v1796
    %v1808 = vpack.c.bf16 %v1799, %v1798
    %v1809 = vpack.c.bf16 %v1801, %v1800
    %v1810 = vld [vmem:[%s5] sm:$0xf]
    %v1811 = vld [vmem:[%s5 + $0x4] sm:$0xf]
    %v1812 = vld [vmem:[%s5 + $0x8] sm:$0xf]
    %v1813 = vld [vmem:[%s5 + $0xc] sm:$0xf]
    %v1814 = vld [vmem:[%s5 + $0x10] sm:$0xf]
    %v1815 = vld [vmem:[%s5 + $0x14] sm:$0xf]
    %v1816 = vld [vmem:[%s5 + $0x18] sm:$0xf]
    %v1817 = vld [vmem:[%s5 + $0x1c] sm:$0xf]
    %v1818 = vld [vmem:[%s5 + $0x20] sm:$0xf]
    %v1819 = vld [vmem:[%s5 + $0x24] sm:$0xf]
    %v1820 = vld [vmem:[%s5 + $0x28] sm:$0xf]
    %v1821 = vld [vmem:[%s5 + $0x2c] sm:$0xf]
    %v1822 = vld [vmem:[%s5 + $0x30] sm:$0xf]
    %v1823 = vld [vmem:[%s5 + $0x34] sm:$0xf]
    %v1824 = vld [vmem:[%s5 + $0x38] sm:$0xf]
    %v1825 = vld [vmem:[%s5 + $0x3c] sm:$0xf]
    %v1826 = vld [vmem:[%s6] sm:$0x1]
    %v1828 = vperm.slane %v1826, 0
    %v1846 = vunpack.c.l.b16 %v1810
    %v1847 = vunpack.c.l.b16 %v1811
    %v1848 = vunpack.c.l.b16 %v1812
    %v1849 = vunpack.c.l.b16 %v1813
    %v1850 = vunpack.c.l.b16 %v1814
    %v1851 = vunpack.c.l.b16 %v1815
    %v1852 = vunpack.c.l.b16 %v1816
    %v1853 = vunpack.c.l.b16 %v1817
    %v1854 = vunpack.c.l.b16 %v1818
    %v1855 = vunpack.c.l.b16 %v1819
    %v1856 = vunpack.c.l.b16 %v1820
    %v1857 = vunpack.c.l.b16 %v1821
    %v1858 = vunpack.c.l.b16 %v1822
    %v1859 = vunpack.c.l.b16 %v1823
    %v1860 = vunpack.c.l.b16 %v1824
    %v1861 = vunpack.c.l.b16 %v1825
    %v1862 = vpack.c.b16 %v1847, %v1846
    %v1863 = vpack.c.b16 %v1849, %v1848
    %v1864 = vpack.c.b16 %v1851, %v1850
    %v1865 = vpack.c.b16 %v1853, %v1852
    %v1866 = vpack.c.b16 %v1855, %v1854
    %v1867 = vpack.c.b16 %v1857, %v1856
    %v1868 = vpack.c.b16 %v1859, %v1858
    %v1869 = vpack.c.b16 %v1861, %v1860
    %1878 = vmatpush.bf16.msra.mxu0 %v1869
    %1879 = vmatpush.bf16.msra.mxu0 %v1868
    %1880 = vmatpush.bf16.msra.mxu0 %v1867
    %1881 = vmatpush.bf16.msra.mxu0 %v1866
    %1882 = vmatpush.bf16.msra.mxu0 %v1865
    %1883 = vmatpush.bf16.msra.mxu0 %v1864
    %1884 = vmatpush.bf16.msra.mxu0 %v1863
    %1885 = vmatpush.bf16.msra.mxu0 %v1862
    %1886 = vmatmul.bf16.gmra.mxu0 %v1802
    %v1887 = vpop.f32.mrf.mxu0
    %v1888 = vadd.f32 %v1828, %v1887
    %v1889 = vpop.f32.mrf.mxu0
    %v1890 = vadd.f32 %v1828, %v1889
    %1891 = vmatmul.bf16.gmra.mxu0 %v1803
    %v1892 = vpop.f32.mrf.mxu0
    %v1893 = vadd.f32 %v1828, %v1892
    %v1894 = vpop.f32.mrf.mxu0
    %v1895 = vadd.f32 %v1828, %v1894
    %1896 = vmatmul.bf16.gmra.mxu0 %v1804
    %v1897 = vpop.f32.mrf.mxu0
    %v1898 = vadd.f32 %v1828, %v1897
    %v1899 = vpop.f32.mrf.mxu0
    %v1900 = vadd.f32 %v1828, %v1899
    %1901 = vmatmul.bf16.gmra.mxu0 %v1805
    %v1902 = vpop.f32.mrf.mxu0
    %v1903 = vadd.f32 %v1828, %v1902
    %v1904 = vpop.f32.mrf.mxu0
    %v1905 = vadd.f32 %v1828, %v1904
    %1906 = vmatmul.bf16.gmra.mxu0 %v1806
    %v1907 = vpop.f32.mrf.mxu0
    %v1908 = vadd.f32 %v1828, %v1907
    %v1909 = vpop.f32.mrf.mxu0
    %v1910 = vadd.f32 %v1828, %v1909
    %1911 = vmatmul.bf16.gmra.mxu0 %v1807
    %v1912 = vpop.f32.mrf.mxu0
    %v1913 = vadd.f32 %v1828, %v1912
    %v1914 = vpop.f32.mrf.mxu0
    %v1915 = vadd.f32 %v1828, %v1914
    %1916 = vmatmul.bf16.gmra.mxu0 %v1808
    %v1917 = vpop.f32.mrf.mxu0
    %v1918 = vadd.f32 %v1828, %v1917
    %v1919 = vpop.f32.mrf.mxu0
    %v1920 = vadd.f32 %v1828, %v1919
    %1921 = vmatmul.bf16.gmra.mxu0 %v1809
    %v1922 = vpop.f32.mrf.mxu0
    %v1923 = vadd.f32 %v1828, %v1922
    %v1924 = vpop.f32.mrf.mxu0
    %v1925 = vadd.f32 %v1828, %v1924
    %1926 = vdwg.mxu0
    %v1927 = vpack.c.bf16 %v1888, %v1888
    %v1928 = vpack.c.bf16 %v1890, %v1890
    %v1929 = vpack.c.bf16 %v1893, %v1893
    %v1930 = vpack.c.bf16 %v1895, %v1895
    %v1931 = vpack.c.bf16 %v1898, %v1898
    %v1932 = vpack.c.bf16 %v1900, %v1900
    %v1933 = vpack.c.bf16 %v1903, %v1903
    %v1934 = vpack.c.bf16 %v1905, %v1905
    %v1935 = vpack.c.bf16 %v1908, %v1908
    %v1936 = vpack.c.bf16 %v1910, %v1910
    %v1937 = vpack.c.bf16 %v1913, %v1913
    %v1938 = vpack.c.bf16 %v1915, %v1915
    %v1939 = vpack.c.bf16 %v1918, %v1918
    %v1940 = vpack.c.bf16 %v1920, %v1920
    %v1941 = vpack.c.bf16 %v1923, %v1923
    %v1942 = vpack.c.bf16 %v1925, %v1925
    %v1959 = vrot.slane %v1927, 3
    %v1960 = vrot.slane %v1928, 3
    %v1961 = vrot.slane %v1929, 3
    %v1962 = vrot.slane %v1930, 3
    %v1963 = vrot.slane %v1931, 3
    %v1964 = vrot.slane %v1932, 3
    %v1965 = vrot.slane %v1933, 3
    %v1966 = vrot.slane %v1934, 3
    %v1967 = vrot.slane %v1935, 3
    %v1968 = vrot.slane %v1936, 3
    %v1969 = vrot.slane %v1937, 3
    %v1970 = vrot.slane %v1938, 3
    %v1971 = vrot.slane %v1939, 3
    %v1972 = vrot.slane %v1940, 3
    %v1973 = vrot.slane %v1941, 3
    %v1974 = vrot.slane %v1942, 3
    %vm1975 = vcmask 1040384
    %v1978 = vsel %vm1975, %v1927, %v1959
    %vm1979 = vcmask 1041409
    %v1980 = vsel %vm1979, %v1927, %v1959
    %v1982 = vrot.slane %v1980, 1
    %vm1983 = vcmask 1042434
    %v1984 = vsel %vm1983, %v1927, %v1959
    %v1986 = vrot.slane %v1984, 2
    %vm1987 = vcmask 1043459
    %v1988 = vsel %vm1987, %v1927, %v1959
    %v1990 = vrot.slane %v1988, 3
    %v1993 = vsel %vm1975, %v1928, %v1960
    %v1994 = vsel %vm1979, %v1928, %v1960
    %v1996 = vrot.slane %v1994, 1
    %v1997 = vsel %vm1983, %v1928, %v1960
    %v1999 = vrot.slane %v1997, 2
    %v2000 = vsel %vm1987, %v1928, %v1960
    %v2002 = vrot.slane %v2000, 3
    %v2005 = vsel %vm1975, %v1929, %v1961
    %v2006 = vsel %vm1979, %v1929, %v1961
    %v2008 = vrot.slane %v2006, 1
    %v2009 = vsel %vm1983, %v1929, %v1961
    %v2011 = vrot.slane %v2009, 2
    %v2012 = vsel %vm1987, %v1929, %v1961
    %v2014 = vrot.slane %v2012, 3
    %v2017 = vsel %vm1975, %v1930, %v1962
    %v2018 = vsel %vm1979, %v1930, %v1962
    %v2020 = vrot.slane %v2018, 1
    %v2021 = vsel %vm1983, %v1930, %v1962
    %v2023 = vrot.slane %v2021, 2
    %v2024 = vsel %vm1987, %v1930, %v1962
    %v2026 = vrot.slane %v2024, 3
    %v2029 = vsel %vm1975, %v1931, %v1963
    %v2030 = vsel %vm1979, %v1931, %v1963
    %v2032 = vrot.slane %v2030, 1
    %v2033 = vsel %vm1983, %v1931, %v1963
    %v2035 = vrot.slane %v2033, 2
    %v2036 = vsel %vm1987, %v1931, %v1963
    %v2038 = vrot.slane %v2036, 3
    %v2041 = vsel %vm1975, %v1932, %v1964
    %v2042 = vsel %vm1979, %v1932, %v1964
    %v2044 = vrot.slane %v2042, 1
    %v2045 = vsel %vm1983, %v1932, %v1964
    %v2047 = vrot.slane %v2045, 2
    %v2048 = vsel %vm1987, %v1932, %v1964
    %v2050 = vrot.slane %v2048, 3
    %v2053 = vsel %vm1975, %v1933, %v1965
    %v2054 = vsel %vm1979, %v1933, %v1965
    %v2056 = vrot.slane %v2054, 1
    %v2057 = vsel %vm1983, %v1933, %v1965
    %v2059 = vrot.slane %v2057, 2
    %v2060 = vsel %vm1987, %v1933, %v1965
    %v2062 = vrot.slane %v2060, 3
    %v2065 = vsel %vm1975, %v1934, %v1966
    %v2066 = vsel %vm1979, %v1934, %v1966
    %v2068 = vrot.slane %v2066, 1
    %v2069 = vsel %vm1983, %v1934, %v1966
    %v2071 = vrot.slane %v2069, 2
    %v2072 = vsel %vm1987, %v1934, %v1966
    %v2074 = vrot.slane %v2072, 3
    %v2077 = vsel %vm1975, %v1935, %v1967
    %v2078 = vsel %vm1979, %v1935, %v1967
    %v2080 = vrot.slane %v2078, 1
    %v2081 = vsel %vm1983, %v1935, %v1967
    %v2083 = vrot.slane %v2081, 2
    %v2084 = vsel %vm1987, %v1935, %v1967
    %v2086 = vrot.slane %v2084, 3
    %v2089 = vsel %vm1975, %v1936, %v1968
    %v2090 = vsel %vm1979, %v1936, %v1968
    %v2092 = vrot.slane %v2090, 1
    %v2093 = vsel %vm1983, %v1936, %v1968
    %v2095 = vrot.slane %v2093, 2
    %v2096 = vsel %vm1987, %v1936, %v1968
    %v2098 = vrot.slane %v2096, 3
    %v2101 = vsel %vm1975, %v1937, %v1969
    %v2102 = vsel %vm1979, %v1937, %v1969
    %v2104 = vrot.slane %v2102, 1
    %v2105 = vsel %vm1983, %v1937, %v1969
    %v2107 = vrot.slane %v2105, 2
    %v2108 = vsel %vm1987, %v1937, %v1969
    %v2110 = vrot.slane %v2108, 3
    %v2113 = vsel %vm1975, %v1938, %v1970
    %v2114 = vsel %vm1979, %v1938, %v1970
    %v2116 = vrot.slane %v2114, 1
    %v2117 = vsel %vm1983, %v1938, %v1970
    %v2119 = vrot.slane %v2117, 2
    %v2120 = vsel %vm1987, %v1938, %v1970
    %v2122 = vrot.slane %v2120, 3
    %v2125 = vsel %vm1975, %v1939, %v1971
    %v2126 = vsel %vm1979, %v1939, %v1971
    %v2128 = vrot.slane %v2126, 1
    %v2129 = vsel %vm1983, %v1939, %v1971
    %v2131 = vrot.slane %v2129, 2
    %v2132 = vsel %vm1987, %v1939, %v1971
    %v2134 = vrot.slane %v2132, 3
    %v2137 = vsel %vm1975, %v1940, %v1972
    %v2138 = vsel %vm1979, %v1940, %v1972
    %v2140 = vrot.slane %v2138, 1
    %v2141 = vsel %vm1983, %v1940, %v1972
    %v2143 = vrot.slane %v2141, 2
    %v2144 = vsel %vm1987, %v1940, %v1972
    %v2146 = vrot.slane %v2144, 3
    %v2149 = vsel %vm1975, %v1941, %v1973
    %v2150 = vsel %vm1979, %v1941, %v1973
    %v2152 = vrot.slane %v2150, 1
    %v2153 = vsel %vm1983, %v1941, %v1973
    %v2155 = vrot.slane %v2153, 2
    %v2156 = vsel %vm1987, %v1941, %v1973
    %v2158 = vrot.slane %v2156, 3
    %v2161 = vsel %vm1975, %v1942, %v1974
    %v2162 = vsel %vm1979, %v1942, %v1974
    %v2164 = vrot.slane %v2162, 1
    %v2165 = vsel %vm1983, %v1942, %v1974
    %v2167 = vrot.slane %v2165, 2
    %v2168 = vsel %vm1987, %v1942, %v1974
    %v2170 = vrot.slane %v2168, 3
    %2235 = vst [vmem:[#allocation2] sm:$0x1] %v1978
    %2236 = vst [vmem:[#allocation2 + $0x1] sm:$0x1] %v1982
    %2237 = vst [vmem:[#allocation2 + $0x2] sm:$0x1] %v1986
    %2238 = vst [vmem:[#allocation2 + $0x3] sm:$0x1] %v1990
    %2239 = vst [vmem:[#allocation2 + $0x4] sm:$0x1] %v1993
    %2240 = vst [vmem:[#allocation2 + $0x5] sm:$0x1] %v1996
    %2241 = vst [vmem:[#allocation2 + $0x6] sm:$0x1] %v1999
    %2242 = vst [vmem:[#allocation2 + $0x7] sm:$0x1] %v2002
    %2243 = vst [vmem:[#allocation2 + $0x8] sm:$0x1] %v2005
    %2244 = vst [vmem:[#allocation2 + $0x9] sm:$0x1] %v2008
    %2245 = vst [vmem:[#allocation2 + $0xa] sm:$0x1] %v2011
    %2246 = vst [vmem:[#allocation2 + $0xb] sm:$0x1] %v2014
    %2247 = vst [vmem:[#allocation2 + $0xc] sm:$0x1] %v2017
    %2248 = vst [vmem:[#allocation2 + $0xd] sm:$0x1] %v2020
    %2249 = vst [vmem:[#allocation2 + $0xe] sm:$0x1] %v2023
    %2250 = vst [vmem:[#allocation2 + $0xf] sm:$0x1] %v2026
    %2251 = vst [vmem:[#allocation2 + $0x10] sm:$0x1] %v2029
    %2252 = vst [vmem:[#allocation2 + $0x11] sm:$0x1] %v2032
    %2253 = vst [vmem:[#allocation2 + $0x12] sm:$0x1] %v2035
    %2254 = vst [vmem:[#allocation2 + $0x13] sm:$0x1] %v2038
    %2255 = vst [vmem:[#allocation2 + $0x14] sm:$0x1] %v2041
    %2256 = vst [vmem:[#allocation2 + $0x15] sm:$0x1] %v2044
    %2257 = vst [vmem:[#allocation2 + $0x16] sm:$0x1] %v2047
    %2258 = vst [vmem:[#allocation2 + $0x17] sm:$0x1] %v2050
    %2259 = vst [vmem:[#allocation2 + $0x18] sm:$0x1] %v2053
    %2260 = vst [vmem:[#allocation2 + $0x19] sm:$0x1] %v2056
    %2261 = vst [vmem:[#allocation2 + $0x1a] sm:$0x1] %v2059
    %2262 = vst [vmem:[#allocation2 + $0x1b] sm:$0x1] %v2062
    %2263 = vst [vmem:[#allocation2 + $0x1c] sm:$0x1] %v2065
    %2264 = vst [vmem:[#allocation2 + $0x1d] sm:$0x1] %v2068
    %2265 = vst [vmem:[#allocation2 + $0x1e] sm:$0x1] %v2071
    %2266 = vst [vmem:[#allocation2 + $0x1f] sm:$0x1] %v2074
    %2267 = vst [vmem:[#allocation2 + $0x20] sm:$0x1] %v2077
    %2268 = vst [vmem:[#allocation2 + $0x21] sm:$0x1] %v2080
    %2269 = vst [vmem:[#allocation2 + $0x22] sm:$0x1] %v2083
    %2270 = vst [vmem:[#allocation2 + $0x23] sm:$0x1] %v2086
    %2271 = vst [vmem:[#allocation2 + $0x24] sm:$0x1] %v2089
    %2272 = vst [vmem:[#allocation2 + $0x25] sm:$0x1] %v2092
    %2273 = vst [vmem:[#allocation2 + $0x26] sm:$0x1] %v2095
    %2274 = vst [vmem:[#allocation2 + $0x27] sm:$0x1] %v2098
    %2275 = vst [vmem:[#allocation2 + $0x28] sm:$0x1] %v2101
    %2276 = vst [vmem:[#allocation2 + $0x29] sm:$0x1] %v2104
    %2277 = vst [vmem:[#allocation2 + $0x2a] sm:$0x1] %v2107
    %2278 = vst [vmem:[#allocation2 + $0x2b] sm:$0x1] %v2110
    %2279 = vst [vmem:[#allocation2 + $0x2c] sm:$0x1] %v2113
    %2280 = vst [vmem:[#allocation2 + $0x2d] sm:$0x1] %v2116
    %2281 = vst [vmem:[#allocation2 + $0x2e] sm:$0x1] %v2119
    %2282 = vst [vmem:[#allocation2 + $0x2f] sm:$0x1] %v2122
    %2283 = vst [vmem:[#allocation2 + $0x30] sm:$0x1] %v2125
    %2284 = vst [vmem:[#allocation2 + $0x31] sm:$0x1] %v2128
    %2285 = vst [vmem:[#allocation2 + $0x32] sm:$0x1] %v2131
    %2286 = vst [vmem:[#allocation2 + $0x33] sm:$0x1] %v2134
    %2287 = vst [vmem:[#allocation2 + $0x34] sm:$0x1] %v2137
    %2288 = vst [vmem:[#allocation2 + $0x35] sm:$0x1] %v2140
    %2289 = vst [vmem:[#allocation2 + $0x36] sm:$0x1] %v2143
    %2290 = vst [vmem:[#allocation2 + $0x37] sm:$0x1] %v2146
    %2291 = vst [vmem:[#allocation2 + $0x38] sm:$0x1] %v2149
    %2292 = vst [vmem:[#allocation2 + $0x39] sm:$0x1] %v2152
    %2293 = vst [vmem:[#allocation2 + $0x3a] sm:$0x1] %v2155
    %2294 = vst [vmem:[#allocation2 + $0x3b] sm:$0x1] %v2158
    %2295 = vst [vmem:[#allocation2 + $0x3c] sm:$0x1] %v2161
    %2296 = vst [vmem:[#allocation2 + $0x3d] sm:$0x1] %v2164
    %2297 = vst [vmem:[#allocation2 + $0x3e] sm:$0x1] %v2167
    %2298 = vst [vmem:[#allocation2 + $0x3f] sm:$0x1] %v2170
    // Predicated region
    $region30: #{_mlp_forward_2d.1} parent=1 // pred_check
      _
    $region31: #{_mlp_forward_2d.1} parent=1 // pred_check_branch
      %2300 = sbr.rel (0) target = $region33
    $region32: #{_mlp_forward_2d.1} parent=1 // pred_region
      // Predicated region
      $region34: #{_mlp_forward_2d.1} parent=32 // pred_check
        _
      $region35: #{_mlp_forward_2d.1} parent=32 // pred_check_branch
        %2302 = sbr.rel (0) target = $region37
      $region36: #{_mlp_forward_2d.1} parent=32 // pred_region
        // Predicated region
        $region38: #{_mlp_forward_2d.1} parent=36 // pred_check
          _
        $region39: #{_mlp_forward_2d.1} parent=36 // pred_check_branch
          %2304 = sbr.rel target = $region41
        $region40: #{_mlp_forward_2d.1} parent=36 // pred_region
          // Predicated region
          $region53: #{_mlp_forward_2d.1} parent=40 // pred_check
            _
          $region54: #{_mlp_forward_2d.1} parent=40 // pred_check_branch
            %2320 = sbr.rel (0) target = $region56
          $region55: #{_mlp_forward_2d.1} parent=40 // pred_region
            %s2322 = ssub.s32 2, 1
            loop: start=0, step=1, limit=1
            $region57: #{_mlp_forward_2d.1} parent=55 // loop_pre_header
              _
            $region58: #{_mlp_forward_2d.1} parent=55 // loop_header
              %s2324 = sphi 0, %s2328
              %p2325 = scmp.ge.s32.totalorder %s2324, 1
              %s2329 = sphi [#allocation2], [#allocation2]
              %s2330 = sphi %s7, %s7
            $region59: #{_mlp_forward_2d.1} parent=55 // loop_header_branch
              %2327 = sbr.rel (%p2325) target = $region63
            $region60: #{_mlp_forward_2d.1} parent=55 // loop_body
              %v2331 = vld [vmem:[%s2329] sm:%s2322]
              %2332 = vst [vmem:[%s2330] sm:%s2322] %v2331
            $region61: #{_mlp_forward_2d.1} parent=55 // loop_footer
              %s2328 = sadd.s32 1, %s2324
            $region62: #{_mlp_forward_2d.1} parent=55 // loop_footer_branch
              %2323 = sbr.rel target = $region58
            $region63: #{_mlp_forward_2d.1} parent=55 // loop_exit
              _
          $region56: #{_mlp_forward_2d.1} parent=40 // pred_fallthru
            _
        $region41: #{_mlp_forward_2d.1} parent=36 // pred_fallthru
          _
        // Predicated region
        $region42: #{_mlp_forward_2d.1} parent=36 // pred_check
          _
        $region43: #{_mlp_forward_2d.1} parent=36 // pred_check_branch
          %2306 = sbr.rel (0) target = $region45
        $region44: #{_mlp_forward_2d.1} parent=36 // pred_region
          %s2308 = ssub.s32 2, 1
          loop: start=0, step=1, limit=1
          $region46: #{_mlp_forward_2d.1} parent=44 // loop_pre_header
            _
          $region47: #{_mlp_forward_2d.1} parent=44 // loop_header
            %s2310 = sphi 0, %s2314
            %p2311 = scmp.ge.s32.totalorder %s2310, 1
            %s2315 = sphi [#allocation2], [#allocation2]
            %s2316 = sphi %s7, %s7
          $region48: #{_mlp_forward_2d.1} parent=44 // loop_header_branch
            %2313 = sbr.rel (%p2311) target = $region52
          $region49: #{_mlp_forward_2d.1} parent=44 // loop_body
            %v2317 = vld [vmem:[%s2315] sm:%s2308]
            %2318 = vst [vmem:[%s2316] sm:%s2308] %v2317
          $region50: #{_mlp_forward_2d.1} parent=44 // loop_footer
            %s2314 = sadd.s32 1, %s2310
          $region51: #{_mlp_forward_2d.1} parent=44 // loop_footer_branch
            %2309 = sbr.rel target = $region47
          $region52: #{_mlp_forward_2d.1} parent=44 // loop_exit
            _
        $region45: #{_mlp_forward_2d.1} parent=36 // pred_fallthru
          _
      $region37: #{_mlp_forward_2d.1} parent=32 // pred_fallthru
        _
      %2333 = vnop
    $region33: #{_mlp_forward_2d.1} parent=1 // pred_fallthru
      _
    // Predicated region
    $region64: #{_mlp_forward_2d.1} parent=1 // pred_check
      _
    $region65: #{_mlp_forward_2d.1} parent=1 // pred_check_branch
      %2335 = sbr.rel (0) target = $region67
    $region66: #{_mlp_forward_2d.1} parent=1 // pred_region
      _
    $region67: #{_mlp_forward_2d.1} parent=1 // pred_fallthru
      _

</llo_original>
